<compile_context>
chip_gen: v7x
topology: tpu7x:2x2x1
jax: 0.10.0
libtpu: 0.0.40
codegen_flags: <defaults>
</compile_context>

<pallas_src>
import math

import jax
import jax.numpy as jnp
from jax import lax
from jax.experimental import pallas as pl
from jax.experimental.pallas import tpu as pltpu


def _layer_norm(x, w, b, eps=1e-5):
    mu = jnp.mean(x, axis=-1, keepdims=True)
    var = jnp.mean((x - mu) ** 2, axis=-1, keepdims=True)
    return (x - mu) * lax.rsqrt(var + eps) * w + b


def _make_encoder_layer_kernel(nhead, apply_final_norm):
    def kernel(src_ref, pos_ref, mask_ref,
               wqk_ref, bqk_ref, wv_ref, bv_ref, wo_ref, bo_ref,
               w1_ref, b1_ref, w2_ref, b2_ref,
               ln1w_ref, ln1b_ref, ln2w_ref, ln2b_ref,
               lnfw_ref, lnfb_ref,
               out_ref):
        src = src_ref[0]                       # (S, D) float32
        pos = pos_ref[0]                       # (S, D)
        addmask = mask_ref[0]                  # (1, S) additive key mask
        S, D = src.shape
        hd = D // nhead
        scale = 1.0 / math.sqrt(hd)

        # ---- fused Q/K projection (+ separate V), bf16 operands, f32 acc ----
        qk_in_bf = (src + pos).astype(jnp.bfloat16)        # cast once
        src_bf = src.astype(jnp.bfloat16)

        qk = jnp.dot(qk_in_bf, wqk_ref[...],
                     preferred_element_type=jnp.float32) + bqk_ref[...]
        q = qk[:, :D] * scale                               # scale hoisted out of loop
        k = qk[:, D:]
        v = jnp.dot(src_bf, wv_ref[...],
                    preferred_element_type=jnp.float32) + bv_ref[...]

        # ---- multi-head self-attention (no explicit transposes) ----
        head_outs = []
        for h in range(nhead):
            lo, hi = h * hd, (h + 1) * hd
            qh = q[:, lo:hi].astype(jnp.bfloat16)
            kh = k[:, lo:hi].astype(jnp.bfloat16)
            vh = v[:, lo:hi].astype(jnp.bfloat16)
            # qh @ kh^T expressed as dot_general contracting the last axes.
            scores = lax.dot_general(qh, kh, (((1,), (1,)), ((), ())),
                                     preferred_element_type=jnp.float32)
            scores = scores + addmask                        # (S,S) + (1,S)
            scores = scores - jnp.max(scores, axis=-1, keepdims=True)
            e = jnp.exp(scores)
            inv = pl.reciprocal(jnp.sum(e, axis=-1, keepdims=True), approx=True)
            p = (e * inv).astype(jnp.bfloat16)
            head_outs.append(jnp.dot(p, vh, preferred_element_type=jnp.float32))

        # Concatenate heads (contiguous along D) -> one full-width K=D matmul.
        o_cat = jnp.concatenate(head_outs, axis=-1).astype(jnp.bfloat16)
        attn = jnp.dot(o_cat, wo_ref[...],
                       preferred_element_type=jnp.float32) + bo_ref[...]

        # ---- residual + LayerNorm1 (f32) ----
        x = _layer_norm(src + attn, ln1w_ref[...], ln1b_ref[...])

        # ---- FFN (ReLU) + residual + LayerNorm2 ----
        h1 = jnp.dot(x.astype(jnp.bfloat16), w1_ref[...],
                     preferred_element_type=jnp.float32) + b1_ref[...]
        h1 = jnp.maximum(h1, 0.0)
        h2 = jnp.dot(h1.astype(jnp.bfloat16), w2_ref[...],
                     preferred_element_type=jnp.float32) + b2_ref[...]
        y = _layer_norm(x + h2, ln2w_ref[...], ln2b_ref[...])

        if apply_final_norm:
            # Final encoder LayerNorm fused into the last layer (saves a full
            # HBM read+write of the activations and an extra pallas_call).
            y = _layer_norm(y, lnfw_ref[...], lnfb_ref[...])

        out_ref[0] = y.astype(out_ref.dtype)

    return kernel


def _encoder_layer_call(x, pos, addmask3, params, nhead, final_norm=None):
    """x, pos: (B, S, D) f32;  addmask3: (B, 1, S) additive float key mask."""
    B, S, D = x.shape
    Fd = params["w1t"].shape[1]
    apply_final = final_norm is not None
    kernel = _make_encoder_layer_kernel(nhead, apply_final)

    if apply_final:
        lnfw, lnfb = final_norm["w"], final_norm["b"]
    else:
        lnfw = jnp.ones((1, D), jnp.float32)
        lnfb = jnp.zeros((1, D), jnp.float32)

    def full_spec(shape):
        n = len(shape)
        return pl.BlockSpec(shape, lambda b, n=n: (0,) * n)

    in_specs = [
        pl.BlockSpec((1, S, D), lambda b: (b, 0, 0)),     # src
        pl.BlockSpec((1, S, D), lambda b: (b, 0, 0)),     # pos
        pl.BlockSpec((1, 1, S), lambda b: (b, 0, 0)),     # additive key mask
        full_spec((D, 2 * D)), full_spec((1, 2 * D)),     # fused Wqk^T, bqk
        full_spec((D, D)), full_spec((1, D)),             # Wv^T, bv
        full_spec((D, D)), full_spec((1, D)),             # Wo^T, bo
        full_spec((D, Fd)), full_spec((1, Fd)),           # W1^T, b1
        full_spec((Fd, D)), full_spec((1, D)),            # W2^T, b2
        full_spec((1, D)), full_spec((1, D)),             # ln1 w, b
        full_spec((1, D)), full_spec((1, D)),             # ln2 w, b
        full_spec((1, D)), full_spec((1, D)),             # final ln w, b (optional)
    ]

    return pl.pallas_call(
        kernel,
        out_shape=jax.ShapeDtypeStruct((B, S, D), x.dtype),
        grid=(B,),
        in_specs=in_specs,
        out_specs=pl.BlockSpec((1, S, D), lambda b: (b, 0, 0)),
        compiler_params=pltpu.CompilerParams(dimension_semantics=("parallel",)),
    )(x, pos, addmask3,
      params["wqkt"], params["bqk"], params["wvt"], params["bv"],
      params["wot"], params["bo"],
      params["w1t"], params["b1"], params["w2t"], params["b2"],
      params["ln1w"], params["ln1b"], params["ln2w"], params["ln2b"],
      lnfw, lnfb)


class TransformerEncoderPallas:
    """Mirror of TransformerEncoder.forward(src, src_mask, vid_len, pos)."""

    def __init__(self, layer_params, nhead, norm_params=None,
                 return_intermediate=False):
        self.layer_params = layer_params          # list -> _get_clones(num_layers)
        self.nhead = nhead
        self.norm_params = norm_params
        self.return_intermediate = return_intermediate

    def __call__(self, src, src_mask, vid_len, pos=None):
        # src, pos: (S, B, D) PyTorch MultiheadAttention convention.
        S, B, D = src.shape
        x = jnp.transpose(src, (1, 0, 2))                       # (B, S, D)
        pos_b = (jnp.zeros_like(x) if pos is None
                 else jnp.transpose(pos, (1, 0, 2)))

        key_idx = jnp.arange(S, dtype=jnp.int32)[None, :]
        pad = key_idx >= vid_len[:, None]
        if src_mask is not None:
            pad = jnp.logical_or(pad, src_mask)
        addmask3 = jnp.where(pad, jnp.float32(-1e30),
                             jnp.float32(0.0)).reshape(B, 1, S)

        n_layers = len(self.layer_params)
        output = x
        intermediate = []
        for i, params in enumerate(self.layer_params):
            fuse_norm = (self.norm_params
                         if (i == n_layers - 1 and self.norm_params is not None
                             and not self.return_intermediate)
                         else None)
            output = _encoder_layer_call(output, pos_b, addmask3, params,
                                         self.nhead, final_norm=fuse_norm)
            if self.return_intermediate:
                intermediate.append(output)

        if self.return_intermediate:
            # Reference discards the post-norm output in this branch and returns
            # the stacked per-layer outputs.
            return jnp.stack([jnp.transpose(o, (1, 0, 2)) for o in intermediate])
        return jnp.transpose(output, (1, 0, 2))                 # (S, B, D)


def init_layer_params(key, d_model, nhead, dim_feedforward, scale=0.02):
    ks = jax.random.split(key, 6)

    def w(k, shape):
        # Weights stored pre-transposed (x @ W^T == x @ Wt) and in bf16 for the MXU.
        return (scale * jax.random.normal(k, shape, jnp.float32)).astype(jnp.bfloat16)

    wq = w(ks[0], (d_model, d_model))
    wk = w(ks[1], (d_model, d_model))
    return {
        "wqkt": jnp.concatenate([wq, wk], axis=1),           # fused (D, 2D)
        "bqk": jnp.zeros((1, 2 * d_model), jnp.float32),
        "wvt": w(ks[2], (d_model, d_model)),
        "bv": jnp.zeros((1, d_model), jnp.float32),
        "wot": w(ks[3], (d_model, d_model)),
        "bo": jnp.zeros((1, d_model), jnp.float32),
        "w1t": w(ks[4], (d_model, dim_feedforward)),
        "b1": jnp.zeros((1, dim_feedforward), jnp.float32),
        "w2t": w(ks[5], (dim_feedforward, d_model)),
        "b2": jnp.zeros((1, d_model), jnp.float32),
        "ln1w": jnp.ones((1, d_model), jnp.float32),
        "ln1b": jnp.zeros((1, d_model), jnp.float32),
        "ln2w": jnp.ones((1, d_model), jnp.float32),
        "ln2b": jnp.zeros((1, d_model), jnp.float32),
    }


if __name__ == "__main__":
    B, S, D = 2, 16, 128
    NHEAD, FFN, NUM_LAYERS = 4, 256, 2

    key = jax.random.PRNGKey(0)
    k_src, k_pos, k_params = jax.random.split(key, 3)

    src = jax.random.normal(k_src, (S, B, D), jnp.float32)      # (seq, batch, d)
    pos = jax.random.normal(k_pos, (S, B, D), jnp.float32)
    vid_len = jnp.array([S, 12], dtype=jnp.int32)               # valid lengths
    src_mask = jnp.zeros((B, S), dtype=jnp.bool_)               # key padding mask

    layer_keys = jax.random.split(k_params, NUM_LAYERS)
    layer_params = [init_layer_params(k, D, NHEAD, FFN) for k in layer_keys]
    norm_params = {"w": jnp.ones((1, D), jnp.float32),
                   "b": jnp.zeros((1, D), jnp.float32)}

    encoder = TransformerEncoderPallas(layer_params, NHEAD,
                                       norm_params=norm_params,
                                       return_intermediate=False)

    out = encoder(src, src_mask, vid_len, pos=pos)
    out = jax.block_until_ready(out)
    assert out.shape == (S, B, D) and out.dtype == jnp.float32
    assert bool(jnp.all(jnp.isfinite(out)))
    print("KERNEL_OK")
</pallas_src>

<mosaic_0001>
module attributes {stable_mosaic.version = 11 : i64} {
  func.func @kernel(%arg0: i32, %arg1: memref<1x16x128xf32, #tpu.memory_space<vmem>>, %arg2: memref<1x16x128xf32, #tpu.memory_space<vmem>>, %arg3: memref<1x1x16xf32, #tpu.memory_space<vmem>>, %arg4: memref<128x256xbf16, #tpu.memory_space<vmem>>, %arg5: memref<1x256xf32, #tpu.memory_space<vmem>>, %arg6: memref<128x128xbf16, #tpu.memory_space<vmem>>, %arg7: memref<1x128xf32, #tpu.memory_space<vmem>>, %arg8: memref<128x128xbf16, #tpu.memory_space<vmem>>, %arg9: memref<1x128xf32, #tpu.memory_space<vmem>>, %arg10: memref<128x256xbf16, #tpu.memory_space<vmem>>, %arg11: memref<1x256xf32, #tpu.memory_space<vmem>>, %arg12: memref<256x128xbf16, #tpu.memory_space<vmem>>, %arg13: memref<1x128xf32, #tpu.memory_space<vmem>>, %arg14: memref<1x128xf32, #tpu.memory_space<vmem>>, %arg15: memref<1x128xf32, #tpu.memory_space<vmem>>, %arg16: memref<1x128xf32, #tpu.memory_space<vmem>>, %arg17: memref<1x128xf32, #tpu.memory_space<vmem>>, %arg18: memref<1x128xf32, #tpu.memory_space<vmem>>, %arg19: memref<1x128xf32, #tpu.memory_space<vmem>>, %arg20: memref<1x16x128xf32, #tpu.memory_space<vmem>>) attributes {dimension_semantics = [#tpu.dimension_semantics<parallel>], iteration_bounds = array<i64: 2>, scalar_prefetch = 0 : i64, scratch_operands = 0 : i64, tpu.core_type = #tpu.core_type<tc>, window_params = [{transform_indices = @transform_0, window_bounds = array<i64: 1, 16, 128>}, {transform_indices = @transform_1, window_bounds = array<i64: 1, 16, 128>}, {transform_indices = @transform_2, window_bounds = array<i64: 1, 1, 16>}, {pipeline_mode = #tpu.pipeline_mode<synchronous>, transform_indices = @transform_3, window_bounds = array<i64: 128, 256>}, {pipeline_mode = #tpu.pipeline_mode<synchronous>, transform_indices = @transform_4, window_bounds = array<i64: 1, 256>}, {pipeline_mode = #tpu.pipeline_mode<synchronous>, transform_indices = @transform_5, window_bounds = array<i64: 128, 128>}, {pipeline_mode = #tpu.pipeline_mode<synchronous>, transform_indices = @transform_6, window_bounds = array<i64: 1, 128>}, {pipeline_mode = #tpu.pipeline_mode<synchronous>, transform_indices = @transform_7, window_bounds = array<i64: 128, 128>}, {pipeline_mode = #tpu.pipeline_mode<synchronous>, transform_indices = @transform_8, window_bounds = array<i64: 1, 128>}, {pipeline_mode = #tpu.pipeline_mode<synchronous>, transform_indices = @transform_9, window_bounds = array<i64: 128, 256>}, {pipeline_mode = #tpu.pipeline_mode<synchronous>, transform_indices = @transform_10, window_bounds = array<i64: 1, 256>}, {pipeline_mode = #tpu.pipeline_mode<synchronous>, transform_indices = @transform_11, window_bounds = array<i64: 256, 128>}, {pipeline_mode = #tpu.pipeline_mode<synchronous>, transform_indices = @transform_12, window_bounds = array<i64: 1, 128>}, {pipeline_mode = #tpu.pipeline_mode<synchronous>, transform_indices = @transform_13, window_bounds = array<i64: 1, 128>}, {pipeline_mode = #tpu.pipeline_mode<synchronous>, transform_indices = @transform_14, window_bounds = array<i64: 1, 128>}, {pipeline_mode = #tpu.pipeline_mode<synchronous>, transform_indices = @transform_15, window_bounds = array<i64: 1, 128>}, {pipeline_mode = #tpu.pipeline_mode<synchronous>, transform_indices = @transform_16, window_bounds = array<i64: 1, 128>}, {pipeline_mode = #tpu.pipeline_mode<synchronous>, transform_indices = @transform_17, window_bounds = array<i64: 1, 128>}, {pipeline_mode = #tpu.pipeline_mode<synchronous>, transform_indices = @transform_18, window_bounds = array<i64: 1, 128>}, {transform_indices = @transform_19, window_bounds = array<i64: 1, 16, 128>}]} {
    %c0 = arith.constant 0 : index
    %c0_0 = arith.constant 0 : index
    %c0_1 = arith.constant 0 : index
    %0 = vector.load %arg1[%c0, %c0_0, %c0_1] : memref<1x16x128xf32, #tpu.memory_space<vmem>>, vector<1x16x128xf32>
    %1 = vector.shape_cast %0 : vector<1x16x128xf32> to vector<16x128xf32>
    %c0_2 = arith.constant 0 : index
    %c0_3 = arith.constant 0 : index
    %c0_4 = arith.constant 0 : index
    %2 = vector.load %arg2[%c0_2, %c0_3, %c0_4] : memref<1x16x128xf32, #tpu.memory_space<vmem>>, vector<1x16x128xf32>
    %3 = vector.shape_cast %2 : vector<1x16x128xf32> to vector<16x128xf32>
    %c0_5 = arith.constant 0 : index
    %c0_6 = arith.constant 0 : index
    %c0_7 = arith.constant 0 : index
    %4 = vector.load %arg3[%c0_5, %c0_6, %c0_7] : memref<1x1x16xf32, #tpu.memory_space<vmem>>, vector<1x1x16xf32>
    %5 = vector.shape_cast %4 : vector<1x1x16xf32> to vector<1x16xf32>
    %6 = arith.addf %1, %3 : vector<16x128xf32>
    %7 = arith.truncf %6 : vector<16x128xf32> to vector<16x128xbf16>
    %8 = arith.truncf %1 : vector<16x128xf32> to vector<16x128xbf16>
    %c0_8 = arith.constant 0 : index
    %c0_9 = arith.constant 0 : index
    %9 = vector.load %arg4[%c0_8, %c0_9] : memref<128x256xbf16, #tpu.memory_space<vmem>>, vector<128x256xbf16>
    %cst = arith.constant dense<0.000000e+00> : vector<16x256xf32>
    %10 = tpu.matmul %7, %9, %cst {dimension_numbers = #tpu.dot_dimension_numbers<[1], [0], [0], [1], [0, 0, 1, 1], [], []>} : vector<16x128xbf16>, vector<128x256xbf16>, vector<16x256xf32> -> vector<16x256xf32>
    %c0_10 = arith.constant 0 : index
    %c0_11 = arith.constant 0 : index
    %11 = vector.load %arg5[%c0_10, %c0_11] : memref<1x256xf32, #tpu.memory_space<vmem>>, vector<1x256xf32>
    %12 = vector.broadcast %11 : vector<1x256xf32> to vector<16x256xf32>
    %13 = arith.addf %10, %12 : vector<16x256xf32>
    %14 = vector.extract_strided_slice %13 {offsets = [0, 0], sizes = [16, 128], strides = [1, 1]} : vector<16x256xf32> to vector<16x128xf32>
    %cst_12 = arith.constant 0.176776692 : f32
    %15 = vector.broadcast %cst_12 : f32 to vector<16x128xf32>
    %16 = arith.mulf %14, %15 : vector<16x128xf32>
    %17 = vector.extract_strided_slice %13 {offsets = [0, 128], sizes = [16, 128], strides = [1, 1]} : vector<16x256xf32> to vector<16x128xf32>
    %c0_13 = arith.constant 0 : index
    %c0_14 = arith.constant 0 : index
    %18 = vector.load %arg6[%c0_13, %c0_14] : memref<128x128xbf16, #tpu.memory_space<vmem>>, vector<128x128xbf16>
    %cst_15 = arith.constant dense<0.000000e+00> : vector<16x128xf32>
    %19 = tpu.matmul %8, %18, %cst_15 {dimension_numbers = #tpu.dot_dimension_numbers<[1], [0], [0], [1], [0, 0, 1, 1], [], []>} : vector<16x128xbf16>, vector<128x128xbf16>, vector<16x128xf32> -> vector<16x128xf32>
    %c0_16 = arith.constant 0 : index
    %c0_17 = arith.constant 0 : index
    %20 = vector.load %arg7[%c0_16, %c0_17] : memref<1x128xf32, #tpu.memory_space<vmem>>, vector<1x128xf32>
    %21 = vector.broadcast %20 : vector<1x128xf32> to vector<16x128xf32>
    %22 = arith.addf %19, %21 : vector<16x128xf32>
    %23 = vector.extract_strided_slice %16 {offsets = [0, 0], sizes = [16, 32], strides = [1, 1]} : vector<16x128xf32> to vector<16x32xf32>
    %24 = arith.truncf %23 : vector<16x32xf32> to vector<16x32xbf16>
    %25 = vector.extract_strided_slice %17 {offsets = [0, 0], sizes = [16, 32], strides = [1, 1]} : vector<16x128xf32> to vector<16x32xf32>
    %26 = arith.truncf %25 : vector<16x32xf32> to vector<16x32xbf16>
    %27 = vector.extract_strided_slice %22 {offsets = [0, 0], sizes = [16, 32], strides = [1, 1]} : vector<16x128xf32> to vector<16x32xf32>
    %28 = arith.truncf %27 : vector<16x32xf32> to vector<16x32xbf16>
    %cst_18 = arith.constant dense<0.000000e+00> : vector<16x16xf32>
    %29 = tpu.matmul %24, %26, %cst_18 {dimension_numbers = #tpu.dot_dimension_numbers<[1], [1], [0], [0], [0, 0, 1, 0], [], []>} : vector<16x32xbf16>, vector<16x32xbf16>, vector<16x16xf32> -> vector<16x16xf32>
    %30 = vector.broadcast %5 : vector<1x16xf32> to vector<16x16xf32>
    %31 = arith.addf %29, %30 : vector<16x16xf32>
    %cst_19 = arith.constant dense<0xFF800000> : vector<16xf32>
    %32 = vector.multi_reduction <maximumf>, %31, %cst_19 [1] : vector<16x16xf32> to vector<16xf32>
    %33 = vector.shape_cast %32 : vector<16xf32> to vector<16x1xf32>
    %34 = vector.broadcast %33 : vector<16x1xf32> to vector<16x16xf32>
    %35 = arith.subf %31, %34 : vector<16x16xf32>
    %36 = math.exp %35 : vector<16x16xf32>
    %cst_20 = arith.constant dense<0.000000e+00> : vector<16xf32>
    %37 = vector.multi_reduction <add>, %36, %cst_20 [1] : vector<16x16xf32> to vector<16xf32>
    %38 = vector.shape_cast %37 : vector<16xf32> to vector<16x1xf32>
    %39 = tpu.reciprocal %38 {approx = true} : vector<16x1xf32> -> vector<16x1xf32>
    %40 = vector.broadcast %39 : vector<16x1xf32> to vector<16x16xf32>
    %41 = arith.mulf %36, %40 : vector<16x16xf32>
    %42 = arith.truncf %41 : vector<16x16xf32> to vector<16x16xbf16>
    %cst_21 = arith.constant dense<0.000000e+00> : vector<16x32xf32>
    %43 = tpu.matmul %42, %28, %cst_21 {dimension_numbers = #tpu.dot_dimension_numbers<[1], [0], [0], [1], [0, 0, 1, 1], [], []>} : vector<16x16xbf16>, vector<16x32xbf16>, vector<16x32xf32> -> vector<16x32xf32>
    %44 = vector.extract_strided_slice %16 {offsets = [0, 32], sizes = [16, 32], strides = [1, 1]} : vector<16x128xf32> to vector<16x32xf32>
    %45 = arith.truncf %44 : vector<16x32xf32> to vector<16x32xbf16>
    %46 = vector.extract_strided_slice %17 {offsets = [0, 32], sizes = [16, 32], strides = [1, 1]} : vector<16x128xf32> to vector<16x32xf32>
    %47 = arith.truncf %46 : vector<16x32xf32> to vector<16x32xbf16>
    %48 = vector.extract_strided_slice %22 {offsets = [0, 32], sizes = [16, 32], strides = [1, 1]} : vector<16x128xf32> to vector<16x32xf32>
    %49 = arith.truncf %48 : vector<16x32xf32> to vector<16x32xbf16>
    %cst_22 = arith.constant dense<0.000000e+00> : vector<16x16xf32>
    %50 = tpu.matmul %45, %47, %cst_22 {dimension_numbers = #tpu.dot_dimension_numbers<[1], [1], [0], [0], [0, 0, 1, 0], [], []>} : vector<16x32xbf16>, vector<16x32xbf16>, vector<16x16xf32> -> vector<16x16xf32>
    %51 = vector.broadcast %5 : vector<1x16xf32> to vector<16x16xf32>
    %52 = arith.addf %50, %51 : vector<16x16xf32>
    %cst_23 = arith.constant dense<0xFF800000> : vector<16xf32>
    %53 = vector.multi_reduction <maximumf>, %52, %cst_23 [1] : vector<16x16xf32> to vector<16xf32>
    %54 = vector.shape_cast %53 : vector<16xf32> to vector<16x1xf32>
    %55 = vector.broadcast %54 : vector<16x1xf32> to vector<16x16xf32>
    %56 = arith.subf %52, %55 : vector<16x16xf32>
    %57 = math.exp %56 : vector<16x16xf32>
    %cst_24 = arith.constant dense<0.000000e+00> : vector<16xf32>
    %58 = vector.multi_reduction <add>, %57, %cst_24 [1] : vector<16x16xf32> to vector<16xf32>
    %59 = vector.shape_cast %58 : vector<16xf32> to vector<16x1xf32>
    %60 = tpu.reciprocal %59 {approx = true} : vector<16x1xf32> -> vector<16x1xf32>
    %61 = vector.broadcast %60 : vector<16x1xf32> to vector<16x16xf32>
    %62 = arith.mulf %57, %61 : vector<16x16xf32>
    %63 = arith.truncf %62 : vector<16x16xf32> to vector<16x16xbf16>
    %cst_25 = arith.constant dense<0.000000e+00> : vector<16x32xf32>
    %64 = tpu.matmul %63, %49, %cst_25 {dimension_numbers = #tpu.dot_dimension_numbers<[1], [0], [0], [1], [0, 0, 1, 1], [], []>} : vector<16x16xbf16>, vector<16x32xbf16>, vector<16x32xf32> -> vector<16x32xf32>
    %65 = vector.extract_strided_slice %16 {offsets = [0, 64], sizes = [16, 32], strides = [1, 1]} : vector<16x128xf32> to vector<16x32xf32>
    %66 = arith.truncf %65 : vector<16x32xf32> to vector<16x32xbf16>
    %67 = vector.extract_strided_slice %17 {offsets = [0, 64], sizes = [16, 32], strides = [1, 1]} : vector<16x128xf32> to vector<16x32xf32>
    %68 = arith.truncf %67 : vector<16x32xf32> to vector<16x32xbf16>
    %69 = vector.extract_strided_slice %22 {offsets = [0, 64], sizes = [16, 32], strides = [1, 1]} : vector<16x128xf32> to vector<16x32xf32>
    %70 = arith.truncf %69 : vector<16x32xf32> to vector<16x32xbf16>
    %cst_26 = arith.constant dense<0.000000e+00> : vector<16x16xf32>
    %71 = tpu.matmul %66, %68, %cst_26 {dimension_numbers = #tpu.dot_dimension_numbers<[1], [1], [0], [0], [0, 0, 1, 0], [], []>} : vector<16x32xbf16>, vector<16x32xbf16>, vector<16x16xf32> -> vector<16x16xf32>
    %72 = vector.broadcast %5 : vector<1x16xf32> to vector<16x16xf32>
    %73 = arith.addf %71, %72 : vector<16x16xf32>
    %cst_27 = arith.constant dense<0xFF800000> : vector<16xf32>
    %74 = vector.multi_reduction <maximumf>, %73, %cst_27 [1] : vector<16x16xf32> to vector<16xf32>
    %75 = vector.shape_cast %74 : vector<16xf32> to vector<16x1xf32>
    %76 = vector.broadcast %75 : vector<16x1xf32> to vector<16x16xf32>
    %77 = arith.subf %73, %76 : vector<16x16xf32>
    %78 = math.exp %77 : vector<16x16xf32>
    %cst_28 = arith.constant dense<0.000000e+00> : vector<16xf32>
    %79 = vector.multi_reduction <add>, %78, %cst_28 [1] : vector<16x16xf32> to vector<16xf32>
    %80 = vector.shape_cast %79 : vector<16xf32> to vector<16x1xf32>
    %81 = tpu.reciprocal %80 {approx = true} : vector<16x1xf32> -> vector<16x1xf32>
    %82 = vector.broadcast %81 : vector<16x1xf32> to vector<16x16xf32>
    %83 = arith.mulf %78, %82 : vector<16x16xf32>
    %84 = arith.truncf %83 : vector<16x16xf32> to vector<16x16xbf16>
    %cst_29 = arith.constant dense<0.000000e+00> : vector<16x32xf32>
    %85 = tpu.matmul %84, %70, %cst_29 {dimension_numbers = #tpu.dot_dimension_numbers<[1], [0], [0], [1], [0, 0, 1, 1], [], []>} : vector<16x16xbf16>, vector<16x32xbf16>, vector<16x32xf32> -> vector<16x32xf32>
    %86 = vector.extract_strided_slice %16 {offsets = [0, 96], sizes = [16, 32], strides = [1, 1]} : vector<16x128xf32> to vector<16x32xf32>
    %87 = arith.truncf %86 : vector<16x32xf32> to vector<16x32xbf16>
    %88 = vector.extract_strided_slice %17 {offsets = [0, 96], sizes = [16, 32], strides = [1, 1]} : vector<16x128xf32> to vector<16x32xf32>
    %89 = arith.truncf %88 : vector<16x32xf32> to vector<16x32xbf16>
    %90 = vector.extract_strided_slice %22 {offsets = [0, 96], sizes = [16, 32], strides = [1, 1]} : vector<16x128xf32> to vector<16x32xf32>
    %91 = arith.truncf %90 : vector<16x32xf32> to vector<16x32xbf16>
    %cst_30 = arith.constant dense<0.000000e+00> : vector<16x16xf32>
    %92 = tpu.matmul %87, %89, %cst_30 {dimension_numbers = #tpu.dot_dimension_numbers<[1], [1], [0], [0], [0, 0, 1, 0], [], []>} : vector<16x32xbf16>, vector<16x32xbf16>, vector<16x16xf32> -> vector<16x16xf32>
    %93 = vector.broadcast %5 : vector<1x16xf32> to vector<16x16xf32>
    %94 = arith.addf %92, %93 : vector<16x16xf32>
    %cst_31 = arith.constant dense<0xFF800000> : vector<16xf32>
    %95 = vector.multi_reduction <maximumf>, %94, %cst_31 [1] : vector<16x16xf32> to vector<16xf32>
    %96 = vector.shape_cast %95 : vector<16xf32> to vector<16x1xf32>
    %97 = vector.broadcast %96 : vector<16x1xf32> to vector<16x16xf32>
    %98 = arith.subf %94, %97 : vector<16x16xf32>
    %99 = math.exp %98 : vector<16x16xf32>
    %cst_32 = arith.constant dense<0.000000e+00> : vector<16xf32>
    %100 = vector.multi_reduction <add>, %99, %cst_32 [1] : vector<16x16xf32> to vector<16xf32>
    %101 = vector.shape_cast %100 : vector<16xf32> to vector<16x1xf32>
    %102 = tpu.reciprocal %101 {approx = true} : vector<16x1xf32> -> vector<16x1xf32>
    %103 = vector.broadcast %102 : vector<16x1xf32> to vector<16x16xf32>
    %104 = arith.mulf %99, %103 : vector<16x16xf32>
    %105 = arith.truncf %104 : vector<16x16xf32> to vector<16x16xbf16>
    %cst_33 = arith.constant dense<0.000000e+00> : vector<16x32xf32>
    %106 = tpu.matmul %105, %91, %cst_33 {dimension_numbers = #tpu.dot_dimension_numbers<[1], [0], [0], [1], [0, 0, 1, 1], [], []>} : vector<16x16xbf16>, vector<16x32xbf16>, vector<16x32xf32> -> vector<16x32xf32>
    %107 = tpu.concatenate %43, %64, %85, %106 in 1 : vector<16x32xf32>, vector<16x32xf32>, vector<16x32xf32>, vector<16x32xf32> -> vector<16x128xf32>
    %108 = arith.truncf %107 : vector<16x128xf32> to vector<16x128xbf16>
    %c0_34 = arith.constant 0 : index
    %c0_35 = arith.constant 0 : index
    %109 = vector.load %arg8[%c0_34, %c0_35] : memref<128x128xbf16, #tpu.memory_space<vmem>>, vector<128x128xbf16>
    %cst_36 = arith.constant dense<0.000000e+00> : vector<16x128xf32>
    %110 = tpu.matmul %108, %109, %cst_36 {dimension_numbers = #tpu.dot_dimension_numbers<[1], [0], [0], [1], [0, 0, 1, 1], [], []>} : vector<16x128xbf16>, vector<128x128xbf16>, vector<16x128xf32> -> vector<16x128xf32>
    %c0_37 = arith.constant 0 : index
    %c0_38 = arith.constant 0 : index
    %111 = vector.load %arg9[%c0_37, %c0_38] : memref<1x128xf32, #tpu.memory_space<vmem>>, vector<1x128xf32>
    %112 = vector.broadcast %111 : vector<1x128xf32> to vector<16x128xf32>
    %113 = arith.addf %110, %112 : vector<16x128xf32>
    %114 = arith.addf %1, %113 : vector<16x128xf32>
    %c0_39 = arith.constant 0 : index
    %c0_40 = arith.constant 0 : index
    %115 = vector.load %arg14[%c0_39, %c0_40] : memref<1x128xf32, #tpu.memory_space<vmem>>, vector<1x128xf32>
    %c0_41 = arith.constant 0 : index
    %c0_42 = arith.constant 0 : index
    %116 = vector.load %arg15[%c0_41, %c0_42] : memref<1x128xf32, #tpu.memory_space<vmem>>, vector<1x128xf32>
    %cst_43 = arith.constant dense<0.000000e+00> : vector<16xf32>
    %117 = vector.multi_reduction <add>, %114, %cst_43 [1] : vector<16x128xf32> to vector<16xf32>
    %118 = vector.shape_cast %117 : vector<16xf32> to vector<16x1xf32>
    %cst_44 = arith.constant 1.280000e+02 : f32
    %119 = vector.broadcast %cst_44 : f32 to vector<16x1xf32>
    %120 = arith.divf %118, %119 : vector<16x1xf32>
    %121 = vector.broadcast %120 : vector<16x1xf32> to vector<16x128xf32>
    %122 = arith.subf %114, %121 : vector<16x128xf32>
    %123 = arith.mulf %122, %122 : vector<16x128xf32>
    %cst_45 = arith.constant dense<0.000000e+00> : vector<16xf32>
    %124 = vector.multi_reduction <add>, %123, %cst_45 [1] : vector<16x128xf32> to vector<16xf32>
    %125 = vector.shape_cast %124 : vector<16xf32> to vector<16x1xf32>
    %cst_46 = arith.constant 1.280000e+02 : f32
    %126 = vector.broadcast %cst_46 : f32 to vector<16x1xf32>
    %127 = arith.divf %125, %126 : vector<16x1xf32>
    %128 = vector.broadcast %120 : vector<16x1xf32> to vector<16x128xf32>
    %129 = arith.subf %114, %128 : vector<16x128xf32>
    %cst_47 = arith.constant 9.99999974E-6 : f32
    %130 = vector.broadcast %cst_47 : f32 to vector<16x1xf32>
    %131 = arith.addf %127, %130 : vector<16x1xf32>
    %132 = math.rsqrt %131 : vector<16x1xf32>
    %133 = vector.broadcast %132 : vector<16x1xf32> to vector<16x128xf32>
    %134 = arith.mulf %129, %133 : vector<16x128xf32>
    %135 = vector.broadcast %115 : vector<1x128xf32> to vector<16x128xf32>
    %136 = arith.mulf %134, %135 : vector<16x128xf32>
    %137 = vector.broadcast %116 : vector<1x128xf32> to vector<16x128xf32>
    %138 = arith.addf %136, %137 : vector<16x128xf32>
    %139 = arith.truncf %138 : vector<16x128xf32> to vector<16x128xbf16>
    %c0_48 = arith.constant 0 : index
    %c0_49 = arith.constant 0 : index
    %140 = vector.load %arg10[%c0_48, %c0_49] : memref<128x256xbf16, #tpu.memory_space<vmem>>, vector<128x256xbf16>
    %cst_50 = arith.constant dense<0.000000e+00> : vector<16x256xf32>
    %141 = tpu.matmul %139, %140, %cst_50 {dimension_numbers = #tpu.dot_dimension_numbers<[1], [0], [0], [1], [0, 0, 1, 1], [], []>} : vector<16x128xbf16>, vector<128x256xbf16>, vector<16x256xf32> -> vector<16x256xf32>
    %c0_51 = arith.constant 0 : index
    %c0_52 = arith.constant 0 : index
    %142 = vector.load %arg11[%c0_51, %c0_52] : memref<1x256xf32, #tpu.memory_space<vmem>>, vector<1x256xf32>
    %143 = vector.broadcast %142 : vector<1x256xf32> to vector<16x256xf32>
    %144 = arith.addf %141, %143 : vector<16x256xf32>
    %cst_53 = arith.constant 0.000000e+00 : f32
    %145 = vector.broadcast %cst_53 : f32 to vector<16x256xf32>
    %146 = arith.maximumf %144, %145 : vector<16x256xf32>
    %147 = arith.truncf %146 : vector<16x256xf32> to vector<16x256xbf16>
    %c0_54 = arith.constant 0 : index
    %c0_55 = arith.constant 0 : index
    %148 = vector.load %arg12[%c0_54, %c0_55] : memref<256x128xbf16, #tpu.memory_space<vmem>>, vector<256x128xbf16>
    %cst_56 = arith.constant dense<0.000000e+00> : vector<16x128xf32>
    %149 = tpu.matmul %147, %148, %cst_56 {dimension_numbers = #tpu.dot_dimension_numbers<[1], [0], [0], [1], [0, 0, 1, 1], [], []>} : vector<16x256xbf16>, vector<256x128xbf16>, vector<16x128xf32> -> vector<16x128xf32>
    %c0_57 = arith.constant 0 : index
    %c0_58 = arith.constant 0 : index
    %150 = vector.load %arg13[%c0_57, %c0_58] : memref<1x128xf32, #tpu.memory_space<vmem>>, vector<1x128xf32>
    %151 = vector.broadcast %150 : vector<1x128xf32> to vector<16x128xf32>
    %152 = arith.addf %149, %151 : vector<16x128xf32>
    %153 = arith.addf %138, %152 : vector<16x128xf32>
    %c0_59 = arith.constant 0 : index
    %c0_60 = arith.constant 0 : index
    %154 = vector.load %arg16[%c0_59, %c0_60] : memref<1x128xf32, #tpu.memory_space<vmem>>, vector<1x128xf32>
    %c0_61 = arith.constant 0 : index
    %c0_62 = arith.constant 0 : index
    %155 = vector.load %arg17[%c0_61, %c0_62] : memref<1x128xf32, #tpu.memory_space<vmem>>, vector<1x128xf32>
    %cst_63 = arith.constant dense<0.000000e+00> : vector<16xf32>
    %156 = vector.multi_reduction <add>, %153, %cst_63 [1] : vector<16x128xf32> to vector<16xf32>
    %157 = vector.shape_cast %156 : vector<16xf32> to vector<16x1xf32>
    %cst_64 = arith.constant 1.280000e+02 : f32
    %158 = vector.broadcast %cst_64 : f32 to vector<16x1xf32>
    %159 = arith.divf %157, %158 : vector<16x1xf32>
    %160 = vector.broadcast %159 : vector<16x1xf32> to vector<16x128xf32>
    %161 = arith.subf %153, %160 : vector<16x128xf32>
    %162 = arith.mulf %161, %161 : vector<16x128xf32>
    %cst_65 = arith.constant dense<0.000000e+00> : vector<16xf32>
    %163 = vector.multi_reduction <add>, %162, %cst_65 [1] : vector<16x128xf32> to vector<16xf32>
    %164 = vector.shape_cast %163 : vector<16xf32> to vector<16x1xf32>
    %cst_66 = arith.constant 1.280000e+02 : f32
    %165 = vector.broadcast %cst_66 : f32 to vector<16x1xf32>
    %166 = arith.divf %164, %165 : vector<16x1xf32>
    %167 = vector.broadcast %159 : vector<16x1xf32> to vector<16x128xf32>
    %168 = arith.subf %153, %167 : vector<16x128xf32>
    %cst_67 = arith.constant 9.99999974E-6 : f32
    %169 = vector.broadcast %cst_67 : f32 to vector<16x1xf32>
    %170 = arith.addf %166, %169 : vector<16x1xf32>
    %171 = math.rsqrt %170 : vector<16x1xf32>
    %172 = vector.broadcast %171 : vector<16x1xf32> to vector<16x128xf32>
    %173 = arith.mulf %168, %172 : vector<16x128xf32>
    %174 = vector.broadcast %154 : vector<1x128xf32> to vector<16x128xf32>
    %175 = arith.mulf %173, %174 : vector<16x128xf32>
    %176 = vector.broadcast %155 : vector<1x128xf32> to vector<16x128xf32>
    %177 = arith.addf %175, %176 : vector<16x128xf32>
    %c0_68 = arith.constant 0 : index
    %c0_69 = arith.constant 0 : index
    %c0_70 = arith.constant 0 : index
    %178 = vector.load %arg20[%c0_68, %c0_69, %c0_70] : memref<1x16x128xf32, #tpu.memory_space<vmem>>, vector<1x16x128xf32>
    %179 = vector.shape_cast %178 : vector<1x16x128xf32> to vector<16x128xf32>
    %180 = vector.shape_cast %177 : vector<16x128xf32> to vector<1x16x128xf32>
    tpu.vector_store %arg20[%c0_68, %c0_69, %c0_70], %180 {strides = array<i32>} : memref<1x16x128xf32, #tpu.memory_space<vmem>>, vector<1x16x128xf32>,
    return
  }
  func.func @transform_0(%arg0: i32) -> (i32, i32, i32) {
    %c0_i32 = arith.constant 0 : i32
    %c0_i32_0 = arith.constant 0 : i32
    %c0_i32_1 = arith.constant 0 : i32
    return %arg0, %c0_i32, %c0_i32_0 : i32, i32, i32
  }
  func.func @transform_1(%arg0: i32) -> (i32, i32, i32) {
    %c0_i32 = arith.constant 0 : i32
    %c0_i32_0 = arith.constant 0 : i32
    %c0_i32_1 = arith.constant 0 : i32
    return %arg0, %c0_i32, %c0_i32_0 : i32, i32, i32
  }
  func.func @transform_2(%arg0: i32) -> (i32, i32, i32) {
    %c0_i32 = arith.constant 0 : i32
    %c0_i32_0 = arith.constant 0 : i32
    %c0_i32_1 = arith.constant 0 : i32
    return %arg0, %c0_i32, %c0_i32_0 : i32, i32, i32
  }
  func.func @transform_3(%arg0: i32) -> (i32, i32) {
    %c0_i32 = arith.constant 0 : i32
    %c0_i32_0 = arith.constant 0 : i32
    %c0_i32_1 = arith.constant 0 : i32
    return %c0_i32, %c0_i32_0 : i32, i32
  }
  func.func @transform_4(%arg0: i32) -> (i32, i32) {
    %c0_i32 = arith.constant 0 : i32
    %c0_i32_0 = arith.constant 0 : i32
    %c0_i32_1 = arith.constant 0 : i32
    return %c0_i32, %c0_i32_0 : i32, i32
  }
  func.func @transform_5(%arg0: i32) -> (i32, i32) {
    %c0_i32 = arith.constant 0 : i32
    %c0_i32_0 = arith.constant 0 : i32
    %c0_i32_1 = arith.constant 0 : i32
    return %c0_i32, %c0_i32_0 : i32, i32
  }
  func.func @transform_6(%arg0: i32) -> (i32, i32) {
    %c0_i32 = arith.constant 0 : i32
    %c0_i32_0 = arith.constant 0 : i32
    %c0_i32_1 = arith.constant 0 : i32
    return %c0_i32, %c0_i32_0 : i32, i32
  }
  func.func @transform_7(%arg0: i32) -> (i32, i32) {
    %c0_i32 = arith.constant 0 : i32
    %c0_i32_0 = arith.constant 0 : i32
    %c0_i32_1 = arith.constant 0 : i32
    return %c0_i32, %c0_i32_0 : i32, i32
  }
  func.func @transform_8(%arg0: i32) -> (i32, i32) {
    %c0_i32 = arith.constant 0 : i32
    %c0_i32_0 = arith.constant 0 : i32
    %c0_i32_1 = arith.constant 0 : i32
    return %c0_i32, %c0_i32_0 : i32, i32
  }
  func.func @transform_9(%arg0: i32) -> (i32, i32) {
    %c0_i32 = arith.constant 0 : i32
    %c0_i32_0 = arith.constant 0 : i32
    %c0_i32_1 = arith.constant 0 : i32
    return %c0_i32, %c0_i32_0 : i32, i32
  }
  func.func @transform_10(%arg0: i32) -> (i32, i32) {
    %c0_i32 = arith.constant 0 : i32
    %c0_i32_0 = arith.constant 0 : i32
    %c0_i32_1 = arith.constant 0 : i32
    return %c0_i32, %c0_i32_0 : i32, i32
  }
  func.func @transform_11(%arg0: i32) -> (i32, i32) {
    %c0_i32 = arith.constant 0 : i32
    %c0_i32_0 = arith.constant 0 : i32
    %c0_i32_1 = arith.constant 0 : i32
    return %c0_i32, %c0_i32_0 : i32, i32
  }
  func.func @transform_12(%arg0: i32) -> (i32, i32) {
    %c0_i32 = arith.constant 0 : i32
    %c0_i32_0 = arith.constant 0 : i32
    %c0_i32_1 = arith.constant 0 : i32
    return %c0_i32, %c0_i32_0 : i32, i32
  }
  func.func @transform_13(%arg0: i32) -> (i32, i32) {
    %c0_i32 = arith.constant 0 : i32
    %c0_i32_0 = arith.constant 0 : i32
    %c0_i32_1 = arith.constant 0 : i32
    return %c0_i32, %c0_i32_0 : i32, i32
  }
  func.func @transform_14(%arg0: i32) -> (i32, i32) {
    %c0_i32 = arith.constant 0 : i32
    %c0_i32_0 = arith.constant 0 : i32
    %c0_i32_1 = arith.constant 0 : i32
    return %c0_i32, %c0_i32_0 : i32, i32
  }
  func.func @transform_15(%arg0: i32) -> (i32, i32) {
    %c0_i32 = arith.constant 0 : i32
    %c0_i32_0 = arith.constant 0 : i32
    %c0_i32_1 = arith.constant 0 : i32
    return %c0_i32, %c0_i32_0 : i32, i32
  }
  func.func @transform_16(%arg0: i32) -> (i32, i32) {
    %c0_i32 = arith.constant 0 : i32
    %c0_i32_0 = arith.constant 0 : i32
    %c0_i32_1 = arith.constant 0 : i32
    return %c0_i32, %c0_i32_0 : i32, i32
  }
  func.func @transform_17(%arg0: i32) -> (i32, i32) {
    %c0_i32 = arith.constant 0 : i32
    %c0_i32_0 = arith.constant 0 : i32
    %c0_i32_1 = arith.constant 0 : i32
    return %c0_i32, %c0_i32_0 : i32, i32
  }
  func.func @transform_18(%arg0: i32) -> (i32, i32) {
    %c0_i32 = arith.constant 0 : i32
    %c0_i32_0 = arith.constant 0 : i32
    %c0_i32_1 = arith.constant 0 : i32
    return %c0_i32, %c0_i32_0 : i32, i32
  }
  func.func @transform_19(%arg0: i32) -> (i32, i32, i32) {
    %c0_i32 = arith.constant 0 : i32
    %c0_i32_0 = arith.constant 0 : i32
    %c0_i32_1 = arith.constant 0 : i32
    return %arg0, %c0_i32, %c0_i32_0 : i32, i32, i32
  }
}

</mosaic_0001>

<llo_original>
// kernel: tpu_custom_call.1
$region0: #{tpu_custom_call.1}
  #allocation0 [shape = 'u32[]', space=smem, size = 0x4, offset = 0x4, fixed_abs, tag = 'smem constant byte address 0x4 - core index']
  #allocation1 [shape = 'u32[144,128]{1,0:T(1,128)}', space=vmem, size = 0x12000, scoped, tag = 'internal scratch']
  %s0 = inlined_call_operand.hbm [shape: f32[2,16,128], index: 0, kind: input, shape index: {}]
  %s1 = inlined_call_operand.hbm [shape: f32[2,16,128], index: 1, kind: input, shape index: {}]
  %s2 = inlined_call_operand.vmem [shape: f32[2,1,16], index: 2, kind: input, shape index: {}]
  %s3 = inlined_call_operand.hbm [shape: bf16[128,256], index: 3, kind: input, shape index: {}]
  %s4 = inlined_call_operand.vmem [shape: f32[1,256], index: 4, kind: input, shape index: {}]
  %s5 = inlined_call_operand.hbm [shape: bf16[128,128], index: 5, kind: input, shape index: {}]
  %s6 = inlined_call_operand.vmem [shape: f32[1,128], index: 6, kind: input, shape index: {}]
  %s7 = inlined_call_operand.hbm [shape: bf16[128,128], index: 7, kind: input, shape index: {}]
  %s8 = inlined_call_operand.vmem [shape: f32[1,128], index: 8, kind: input, shape index: {}]
  %s9 = inlined_call_operand.hbm [shape: bf16[128,256], index: 9, kind: input, shape index: {}]
  %s10 = inlined_call_operand.vmem [shape: f32[1,256], index: 10, kind: input, shape index: {}]
  %s11 = inlined_call_operand.hbm [shape: bf16[256,128], index: 11, kind: input, shape index: {}]
  %s12 = inlined_call_operand.vmem [shape: f32[1,128], index: 12, kind: input, shape index: {}]
  %s13 = inlined_call_operand.vmem [shape: f32[1,128], index: 13, kind: input, shape index: {}]
  %s14 = inlined_call_operand.vmem [shape: f32[1,128], index: 14, kind: input, shape index: {}]
  %s15 = inlined_call_operand.vmem [shape: f32[1,128], index: 15, kind: input, shape index: {}]
  %s16 = inlined_call_operand.vmem [shape: f32[1,128], index: 16, kind: input, shape index: {}]
  %s17 = inlined_call_operand.vmem [shape: f32[1,128], index: 17, kind: input, shape index: {}]
  %s18 = inlined_call_operand.vmem [shape: f32[1,128], index: 18, kind: input, shape index: {}]
  %s19 = inlined_call_operand.hbm [shape: f32[2,16,128], index: 19, kind: output, shape index: {}]
  %s20 = sld [smem:[#allocation0]]
  $region137: #{tpu_custom_call.1} parent=0
    _
  %s22 = ssub.s32 1, %s20
  %s23 = scalar_select 0, %s22, %s20
  $region1: #{tpu_custom_call.1} parent=0
    #allocation2 [shape = 'u8[16384]{0}', space=vmem, size = 0x4000, scoped, tag = 'input window, operand 0']
    #allocation3 [shape = 's32[2]{0}', space=sflag, size = 0x8, scoped, tag = 'scoped memory for tpu_custom_call.1']
    #allocation4 [shape = 's32[2]{0}', space=sflag, size = 0x8, scoped, tag = 'scoped memory for tpu_custom_call.1']
    #allocation5 [shape = 'u8[16384]{0}', space=vmem, size = 0x4000, scoped, tag = 'input window, operand 1']
    #allocation6 [shape = 's32[2]{0}', space=sflag, size = 0x8, scoped, tag = 'scoped memory for tpu_custom_call.1']
    #allocation7 [shape = 'u8[65536]{0}', space=vmem, size = 0x10000, scoped, tag = 'input window, operand 3, single buffered']
    #allocation8 [shape = 'u8[32768]{0}', space=vmem, size = 0x8000, scoped, tag = 'input window, operand 5, single buffered']
    #allocation9 [shape = 's32[1]{0}', space=sflag, size = 0x4, scoped, tag = 'scoped memory for tpu_custom_call.1']
    #allocation10 [shape = 'u8[32768]{0}', space=vmem, size = 0x8000, scoped, tag = 'input window, operand 7, single buffered']
    #allocation11 [shape = 'u8[65536]{0}', space=vmem, size = 0x10000, scoped, tag = 'input window, operand 9, single buffered']
    #allocation12 [shape = 's32[1]{0}', space=sflag, size = 0x4, scoped, tag = 'scoped memory for tpu_custom_call.1']
    #allocation13 [shape = 'u8[65536]{0}', space=vmem, size = 0x10000, scoped, tag = 'input window, operand 11, single buffered']
    #allocation14 [shape = 'u8[16384]{0}', space=vmem, size = 0x4000, scoped, tag = 'output window, operand 0']
    %24 = vsyncpa [#allocation3], 0
    %s25 = scalar_lea.sflag [#allocation3], 1
    %26 = vsyncpa %s25, 0
    %27 = vsyncpa [#allocation6], 0
    %s28 = scalar_lea.sflag [#allocation6], 1
    %29 = vsyncpa %s28, 0
    %30 = vsyncpa [#allocation9], 0
    %31 = vsyncpa [#allocation12], 0
    %32 = vsyncpa [#allocation4], 0
    %s33 = scalar_lea.sflag [#allocation4], 1
    %34 = vsyncpa %s33, 0
    loop: start=0, step=1, limit=4
    $region2: #{tpu_custom_call.1} parent=1 // loop_pre_header
      _
    $region3: #{tpu_custom_call.1} parent=1 // loop_header
      %s36 = sphi 0, %s40
      %p37 = scmp.ge.s32.totalorder %s36, 4
      %s46 = sphi 0, %s48
      %s49 = sphi 0, %s46
      %s50 = sphi 0, %s49
      %s66 = sphi 0, %s50
      %s72 = sphi 0, %s74
      %s75 = sphi 0, %s72
      %s76 = sphi 0, %s75
      %s92 = sphi 0, %s76
      %s98 = sphi 0, %s100
      %s101 = sphi 0, %s98
      %s102 = sphi 0, %s101
      %s118 = sphi 0, %s102
      %s122 = sphi 0, %s122
      %s124 = sphi 0, %s122
      %s125 = sphi 0, %s124
      %s139 = sphi 0, %s125
      %s143 = sphi 0, %s143
      %s145 = sphi 0, %s143
      %s146 = sphi 0, %s145
      %s160 = sphi 0, %s146
      %s164 = sphi 0, %s164
      %s166 = sphi 0, %s164
      %s167 = sphi 0, %s166
      %s181 = sphi 0, %s167
      %s185 = sphi 0, %s185
      %s187 = sphi 0, %s185
      %s188 = sphi 0, %s187
      %s202 = sphi 0, %s188
      %s206 = sphi 0, %s206
      %s208 = sphi 0, %s206
      %s209 = sphi 0, %s208
      %s223 = sphi 0, %s209
      %s227 = sphi 0, %s227
      %s229 = sphi 0, %s227
      %s230 = sphi 0, %s229
      %s244 = sphi 0, %s230
      %s248 = sphi 0, %s248
      %s250 = sphi 0, %s248
      %s251 = sphi 0, %s250
      %s265 = sphi 0, %s251
      %s269 = sphi 0, %s269
      %s271 = sphi 0, %s269
      %s272 = sphi 0, %s271
      %s286 = sphi 0, %s272
      %s290 = sphi 0, %s290
      %s292 = sphi 0, %s290
      %s293 = sphi 0, %s292
      %s307 = sphi 0, %s293
      %s311 = sphi 0, %s311
      %s313 = sphi 0, %s311
      %s314 = sphi 0, %s313
      %s328 = sphi 0, %s314
      %s332 = sphi 0, %s332
      %s334 = sphi 0, %s332
      %s335 = sphi 0, %s334
      %s349 = sphi 0, %s335
      %s353 = sphi 0, %s353
      %s355 = sphi 0, %s353
      %s356 = sphi 0, %s355
      %s370 = sphi 0, %s356
      %s374 = sphi 0, %s374
      %s376 = sphi 0, %s374
      %s377 = sphi 0, %s376
      %s391 = sphi 0, %s377
      %s395 = sphi 0, %s395
      %s397 = sphi 0, %s395
      %s398 = sphi 0, %s397
      %s412 = sphi 0, %s398
      %s416 = sphi 0, %s416
      %s418 = sphi 0, %s416
      %s419 = sphi 0, %s418
      %s433 = sphi 0, %s419
      %s437 = sphi 0, %s437
      %s439 = sphi 0, %s437
      %s440 = sphi 0, %s439
      %s454 = sphi 0, %s440
      %s460 = sphi 0, %s462
      %s463 = sphi 0, %s460
      %s464 = sphi 0, %s463
      %s480 = sphi 0, %s464
    $region4: #{tpu_custom_call.1} parent=1 // loop_header_branch
      %39 = sbr.rel (%p37) target = $region8
    $region5: #{tpu_custom_call.1} parent=1 // loop_body
      %s41 = ssub.s32 %s36, 1
      %s42 = ssub.s32 %s36, 2
      %s43 = sadd.s32 %s36, 1
      %s44 = ssub.s32 %s36, %s43
      %p45 = scmp.eq.s32.totalorder %s44, 0
      %s47 = sadd.s32 %s46, 1
      %s48 = scalar_select %p45, %s46, %s47
      %p51 = pneg %p45
      %p52 = scmp.eq.s32.totalorder %s36, 1
      %p53 = por %p51, %p52
      %p54 = scmp.ne.s32.totalorder %s46, %s49
      %p55 = scmp.eq.s32.totalorder %s36, 0
      %p56 = por %p54, %p55
      %p57 = scmp.ne.s32.totalorder %s46, %s49
      %p58 = scmp.eq.s32.totalorder %s41, 1
      %p59 = por %p57, %p58
      %p60 = scmp.ne.s32.totalorder %s49, %s50
      %p61 = scmp.eq.s32.totalorder %s41, 0
      %p62 = por %p60, %p61
      %p63 = scmp.ne.s32.totalorder %s49, %s50
      %p64 = scmp.eq.s32.totalorder %s42, 1
      %p65 = por %p63, %p64
      %p67 = scmp.ne.s32.totalorder %s50, %s66
      %p68 = scmp.eq.s32.totalorder %s42, 0
      %p69 = por %p67, %p68
      %s70 = ssub.s32 %s36, %s43
      %p71 = scmp.eq.s32.totalorder %s70, 0
      %s73 = sadd.s32 %s72, 1
      %s74 = scalar_select %p71, %s72, %s73
      %p77 = pneg %p71
      %p78 = scmp.eq.s32.totalorder %s36, 1
      %p79 = por %p77, %p78
      %p80 = scmp.ne.s32.totalorder %s72, %s75
      %p81 = scmp.eq.s32.totalorder %s36, 0
      %p82 = por %p80, %p81
      %p83 = scmp.ne.s32.totalorder %s72, %s75
      %p84 = scmp.eq.s32.totalorder %s41, 1
      %p85 = por %p83, %p84
      %p86 = scmp.ne.s32.totalorder %s75, %s76
      %p87 = scmp.eq.s32.totalorder %s41, 0
      %p88 = por %p86, %p87
      %p89 = scmp.ne.s32.totalorder %s75, %s76
      %p90 = scmp.eq.s32.totalorder %s42, 1
      %p91 = por %p89, %p90
      %p93 = scmp.ne.s32.totalorder %s76, %s92
      %p94 = scmp.eq.s32.totalorder %s42, 0
      %p95 = por %p93, %p94
      %s96 = ssub.s32 %s36, %s43
      %p97 = scmp.eq.s32.totalorder %s96, 0
      %s99 = sadd.s32 %s98, 1
      %s100 = scalar_select %p97, %s98, %s99
      %p103 = pneg %p97
      %p104 = scmp.eq.s32.totalorder %s36, 1
      %p105 = por %p103, %p104
      %p106 = scmp.ne.s32.totalorder %s98, %s101
      %p107 = scmp.eq.s32.totalorder %s36, 0
      %p108 = por %p106, %p107
      %p109 = scmp.ne.s32.totalorder %s98, %s101
      %p110 = scmp.eq.s32.totalorder %s41, 1
      %p111 = por %p109, %p110
      %p112 = scmp.ne.s32.totalorder %s101, %s102
      %p113 = scmp.eq.s32.totalorder %s41, 0
      %p114 = por %p112, %p113
      %p115 = scmp.ne.s32.totalorder %s101, %s102
      %p116 = scmp.eq.s32.totalorder %s42, 1
      %p117 = por %p115, %p116
      %p119 = scmp.ne.s32.totalorder %s102, %s118
      %p120 = scmp.eq.s32.totalorder %s42, 0
      %p121 = por %p119, %p120
      %s123 = sadd.s32 %s122, 1
      %p126 = scmp.eq.s32.totalorder %s36, 1
      %p127 = scmp.ne.s32.totalorder %s122, %s124
      %p128 = scmp.eq.s32.totalorder %s36, 0
      %p129 = por %p127, %p128
      %p130 = scmp.ne.s32.totalorder %s122, %s124
      %p131 = scmp.eq.s32.totalorder %s41, 1
      %p132 = por %p130, %p131
      %p133 = scmp.ne.s32.totalorder %s124, %s125
      %p134 = scmp.eq.s32.totalorder %s41, 0
      %p135 = por %p133, %p134
      %p136 = scmp.ne.s32.totalorder %s124, %s125
      %p137 = scmp.eq.s32.totalorder %s42, 1
      %p138 = por %p136, %p137
      %p140 = scmp.ne.s32.totalorder %s125, %s139
      %p141 = scmp.eq.s32.totalorder %s42, 0
      %p142 = por %p140, %p141
      %s144 = sadd.s32 %s143, 1
      %p147 = scmp.eq.s32.totalorder %s36, 1
      %p148 = scmp.ne.s32.totalorder %s143, %s145
      %p149 = scmp.eq.s32.totalorder %s36, 0
      %p150 = por %p148, %p149
      %p151 = scmp.ne.s32.totalorder %s143, %s145
      %p152 = scmp.eq.s32.totalorder %s41, 1
      %p153 = por %p151, %p152
      %p154 = scmp.ne.s32.totalorder %s145, %s146
      %p155 = scmp.eq.s32.totalorder %s41, 0
      %p156 = por %p154, %p155
      %p157 = scmp.ne.s32.totalorder %s145, %s146
      %p158 = scmp.eq.s32.totalorder %s42, 1
      %p159 = por %p157, %p158
      %p161 = scmp.ne.s32.totalorder %s146, %s160
      %p162 = scmp.eq.s32.totalorder %s42, 0
      %p163 = por %p161, %p162
      %s165 = sadd.s32 %s164, 1
      %p168 = scmp.eq.s32.totalorder %s36, 1
      %p169 = scmp.ne.s32.totalorder %s164, %s166
      %p170 = scmp.eq.s32.totalorder %s36, 0
      %p171 = por %p169, %p170
      %p172 = scmp.ne.s32.totalorder %s164, %s166
      %p173 = scmp.eq.s32.totalorder %s41, 1
      %p174 = por %p172, %p173
      %p175 = scmp.ne.s32.totalorder %s166, %s167
      %p176 = scmp.eq.s32.totalorder %s41, 0
      %p177 = por %p175, %p176
      %p178 = scmp.ne.s32.totalorder %s166, %s167
      %p179 = scmp.eq.s32.totalorder %s42, 1
      %p180 = por %p178, %p179
      %p182 = scmp.ne.s32.totalorder %s167, %s181
      %p183 = scmp.eq.s32.totalorder %s42, 0
      %p184 = por %p182, %p183
      %s186 = sadd.s32 %s185, 1
      %p189 = scmp.eq.s32.totalorder %s36, 1
      %p190 = scmp.ne.s32.totalorder %s185, %s187
      %p191 = scmp.eq.s32.totalorder %s36, 0
      %p192 = por %p190, %p191
      %p193 = scmp.ne.s32.totalorder %s185, %s187
      %p194 = scmp.eq.s32.totalorder %s41, 1
      %p195 = por %p193, %p194
      %p196 = scmp.ne.s32.totalorder %s187, %s188
      %p197 = scmp.eq.s32.totalorder %s41, 0
      %p198 = por %p196, %p197
      %p199 = scmp.ne.s32.totalorder %s187, %s188
      %p200 = scmp.eq.s32.totalorder %s42, 1
      %p201 = por %p199, %p200
      %p203 = scmp.ne.s32.totalorder %s188, %s202
      %p204 = scmp.eq.s32.totalorder %s42, 0
      %p205 = por %p203, %p204
      %s207 = sadd.s32 %s206, 1
      %p210 = scmp.eq.s32.totalorder %s36, 1
      %p211 = scmp.ne.s32.totalorder %s206, %s208
      %p212 = scmp.eq.s32.totalorder %s36, 0
      %p213 = por %p211, %p212
      %p214 = scmp.ne.s32.totalorder %s206, %s208
      %p215 = scmp.eq.s32.totalorder %s41, 1
      %p216 = por %p214, %p215
      %p217 = scmp.ne.s32.totalorder %s208, %s209
      %p218 = scmp.eq.s32.totalorder %s41, 0
      %p219 = por %p217, %p218
      %p220 = scmp.ne.s32.totalorder %s208, %s209
      %p221 = scmp.eq.s32.totalorder %s42, 1
      %p222 = por %p220, %p221
      %p224 = scmp.ne.s32.totalorder %s209, %s223
      %p225 = scmp.eq.s32.totalorder %s42, 0
      %p226 = por %p224, %p225
      %s228 = sadd.s32 %s227, 1
      %p231 = scmp.eq.s32.totalorder %s36, 1
      %p232 = scmp.ne.s32.totalorder %s227, %s229
      %p233 = scmp.eq.s32.totalorder %s36, 0
      %p234 = por %p232, %p233
      %p235 = scmp.ne.s32.totalorder %s227, %s229
      %p236 = scmp.eq.s32.totalorder %s41, 1
      %p237 = por %p235, %p236
      %p238 = scmp.ne.s32.totalorder %s229, %s230
      %p239 = scmp.eq.s32.totalorder %s41, 0
      %p240 = por %p238, %p239
      %p241 = scmp.ne.s32.totalorder %s229, %s230
      %p242 = scmp.eq.s32.totalorder %s42, 1
      %p243 = por %p241, %p242
      %p245 = scmp.ne.s32.totalorder %s230, %s244
      %p246 = scmp.eq.s32.totalorder %s42, 0
      %p247 = por %p245, %p246
      %s249 = sadd.s32 %s248, 1
      %p252 = scmp.eq.s32.totalorder %s36, 1
      %p253 = scmp.ne.s32.totalorder %s248, %s250
      %p254 = scmp.eq.s32.totalorder %s36, 0
      %p255 = por %p253, %p254
      %p256 = scmp.ne.s32.totalorder %s248, %s250
      %p257 = scmp.eq.s32.totalorder %s41, 1
      %p258 = por %p256, %p257
      %p259 = scmp.ne.s32.totalorder %s250, %s251
      %p260 = scmp.eq.s32.totalorder %s41, 0
      %p261 = por %p259, %p260
      %p262 = scmp.ne.s32.totalorder %s250, %s251
      %p263 = scmp.eq.s32.totalorder %s42, 1
      %p264 = por %p262, %p263
      %p266 = scmp.ne.s32.totalorder %s251, %s265
      %p267 = scmp.eq.s32.totalorder %s42, 0
      %p268 = por %p266, %p267
      %s270 = sadd.s32 %s269, 1
      %p273 = scmp.eq.s32.totalorder %s36, 1
      %p274 = scmp.ne.s32.totalorder %s269, %s271
      %p275 = scmp.eq.s32.totalorder %s36, 0
      %p276 = por %p274, %p275
      %p277 = scmp.ne.s32.totalorder %s269, %s271
      %p278 = scmp.eq.s32.totalorder %s41, 1
      %p279 = por %p277, %p278
      %p280 = scmp.ne.s32.totalorder %s271, %s272
      %p281 = scmp.eq.s32.totalorder %s41, 0
      %p282 = por %p280, %p281
      %p283 = scmp.ne.s32.totalorder %s271, %s272
      %p284 = scmp.eq.s32.totalorder %s42, 1
      %p285 = por %p283, %p284
      %p287 = scmp.ne.s32.totalorder %s272, %s286
      %p288 = scmp.eq.s32.totalorder %s42, 0
      %p289 = por %p287, %p288
      %s291 = sadd.s32 %s290, 1
      %p294 = scmp.eq.s32.totalorder %s36, 1
      %p295 = scmp.ne.s32.totalorder %s290, %s292
      %p296 = scmp.eq.s32.totalorder %s36, 0
      %p297 = por %p295, %p296
      %p298 = scmp.ne.s32.totalorder %s290, %s292
      %p299 = scmp.eq.s32.totalorder %s41, 1
      %p300 = por %p298, %p299
      %p301 = scmp.ne.s32.totalorder %s292, %s293
      %p302 = scmp.eq.s32.totalorder %s41, 0
      %p303 = por %p301, %p302
      %p304 = scmp.ne.s32.totalorder %s292, %s293
      %p305 = scmp.eq.s32.totalorder %s42, 1
      %p306 = por %p304, %p305
      %p308 = scmp.ne.s32.totalorder %s293, %s307
      %p309 = scmp.eq.s32.totalorder %s42, 0
      %p310 = por %p308, %p309
      %s312 = sadd.s32 %s311, 1
      %p315 = scmp.eq.s32.totalorder %s36, 1
      %p316 = scmp.ne.s32.totalorder %s311, %s313
      %p317 = scmp.eq.s32.totalorder %s36, 0
      %p318 = por %p316, %p317
      %p319 = scmp.ne.s32.totalorder %s311, %s313
      %p320 = scmp.eq.s32.totalorder %s41, 1
      %p321 = por %p319, %p320
      %p322 = scmp.ne.s32.totalorder %s313, %s314
      %p323 = scmp.eq.s32.totalorder %s41, 0
      %p324 = por %p322, %p323
      %p325 = scmp.ne.s32.totalorder %s313, %s314
      %p326 = scmp.eq.s32.totalorder %s42, 1
      %p327 = por %p325, %p326
      %p329 = scmp.ne.s32.totalorder %s314, %s328
      %p330 = scmp.eq.s32.totalorder %s42, 0
      %p331 = por %p329, %p330
      %s333 = sadd.s32 %s332, 1
      %p336 = scmp.eq.s32.totalorder %s36, 1
      %p337 = scmp.ne.s32.totalorder %s332, %s334
      %p338 = scmp.eq.s32.totalorder %s36, 0
      %p339 = por %p337, %p338
      %p340 = scmp.ne.s32.totalorder %s332, %s334
      %p341 = scmp.eq.s32.totalorder %s41, 1
      %p342 = por %p340, %p341
      %p343 = scmp.ne.s32.totalorder %s334, %s335
      %p344 = scmp.eq.s32.totalorder %s41, 0
      %p345 = por %p343, %p344
      %p346 = scmp.ne.s32.totalorder %s334, %s335
      %p347 = scmp.eq.s32.totalorder %s42, 1
      %p348 = por %p346, %p347
      %p350 = scmp.ne.s32.totalorder %s335, %s349
      %p351 = scmp.eq.s32.totalorder %s42, 0
      %p352 = por %p350, %p351
      %s354 = sadd.s32 %s353, 1
      %p357 = scmp.eq.s32.totalorder %s36, 1
      %p358 = scmp.ne.s32.totalorder %s353, %s355
      %p359 = scmp.eq.s32.totalorder %s36, 0
      %p360 = por %p358, %p359
      %p361 = scmp.ne.s32.totalorder %s353, %s355
      %p362 = scmp.eq.s32.totalorder %s41, 1
      %p363 = por %p361, %p362
      %p364 = scmp.ne.s32.totalorder %s355, %s356
      %p365 = scmp.eq.s32.totalorder %s41, 0
      %p366 = por %p364, %p365
      %p367 = scmp.ne.s32.totalorder %s355, %s356
      %p368 = scmp.eq.s32.totalorder %s42, 1
      %p369 = por %p367, %p368
      %p371 = scmp.ne.s32.totalorder %s356, %s370
      %p372 = scmp.eq.s32.totalorder %s42, 0
      %p373 = por %p371, %p372
      %s375 = sadd.s32 %s374, 1
      %p378 = scmp.eq.s32.totalorder %s36, 1
      %p379 = scmp.ne.s32.totalorder %s374, %s376
      %p380 = scmp.eq.s32.totalorder %s36, 0
      %p381 = por %p379, %p380
      %p382 = scmp.ne.s32.totalorder %s374, %s376
      %p383 = scmp.eq.s32.totalorder %s41, 1
      %p384 = por %p382, %p383
      %p385 = scmp.ne.s32.totalorder %s376, %s377
      %p386 = scmp.eq.s32.totalorder %s41, 0
      %p387 = por %p385, %p386
      %p388 = scmp.ne.s32.totalorder %s376, %s377
      %p389 = scmp.eq.s32.totalorder %s42, 1
      %p390 = por %p388, %p389
      %p392 = scmp.ne.s32.totalorder %s377, %s391
      %p393 = scmp.eq.s32.totalorder %s42, 0
      %p394 = por %p392, %p393
      %s396 = sadd.s32 %s395, 1
      %p399 = scmp.eq.s32.totalorder %s36, 1
      %p400 = scmp.ne.s32.totalorder %s395, %s397
      %p401 = scmp.eq.s32.totalorder %s36, 0
      %p402 = por %p400, %p401
      %p403 = scmp.ne.s32.totalorder %s395, %s397
      %p404 = scmp.eq.s32.totalorder %s41, 1
      %p405 = por %p403, %p404
      %p406 = scmp.ne.s32.totalorder %s397, %s398
      %p407 = scmp.eq.s32.totalorder %s41, 0
      %p408 = por %p406, %p407
      %p409 = scmp.ne.s32.totalorder %s397, %s398
      %p410 = scmp.eq.s32.totalorder %s42, 1
      %p411 = por %p409, %p410
      %p413 = scmp.ne.s32.totalorder %s398, %s412
      %p414 = scmp.eq.s32.totalorder %s42, 0
      %p415 = por %p413, %p414
      %s417 = sadd.s32 %s416, 1
      %p420 = scmp.eq.s32.totalorder %s36, 1
      %p421 = scmp.ne.s32.totalorder %s416, %s418
      %p422 = scmp.eq.s32.totalorder %s36, 0
      %p423 = por %p421, %p422
      %p424 = scmp.ne.s32.totalorder %s416, %s418
      %p425 = scmp.eq.s32.totalorder %s41, 1
      %p426 = por %p424, %p425
      %p427 = scmp.ne.s32.totalorder %s418, %s419
      %p428 = scmp.eq.s32.totalorder %s41, 0
      %p429 = por %p427, %p428
      %p430 = scmp.ne.s32.totalorder %s418, %s419
      %p431 = scmp.eq.s32.totalorder %s42, 1
      %p432 = por %p430, %p431
      %p434 = scmp.ne.s32.totalorder %s419, %s433
      %p435 = scmp.eq.s32.totalorder %s42, 0
      %p436 = por %p434, %p435
      %s438 = sadd.s32 %s437, 1
      %p441 = scmp.eq.s32.totalorder %s36, 1
      %p442 = scmp.ne.s32.totalorder %s437, %s439
      %p443 = scmp.eq.s32.totalorder %s36, 0
      %p444 = por %p442, %p443
      %p445 = scmp.ne.s32.totalorder %s437, %s439
      %p446 = scmp.eq.s32.totalorder %s41, 1
      %p447 = por %p445, %p446
      %p448 = scmp.ne.s32.totalorder %s439, %s440
      %p449 = scmp.eq.s32.totalorder %s41, 0
      %p450 = por %p448, %p449
      %p451 = scmp.ne.s32.totalorder %s439, %s440
      %p452 = scmp.eq.s32.totalorder %s42, 1
      %p453 = por %p451, %p452
      %p455 = scmp.ne.s32.totalorder %s440, %s454
      %p456 = scmp.eq.s32.totalorder %s42, 0
      %p457 = por %p455, %p456
      %s458 = ssub.s32 %s36, %s43
      %p459 = scmp.eq.s32.totalorder %s458, 0
      %s461 = sadd.s32 %s460, 1
      %s462 = scalar_select %p459, %s460, %s461
      %p465 = pneg %p459
      %p466 = scmp.eq.s32.totalorder %s36, 1
      %p467 = por %p465, %p466
      %p468 = scmp.ne.s32.totalorder %s460, %s463
      %p469 = scmp.eq.s32.totalorder %s36, 0
      %p470 = por %p468, %p469
      %p471 = scmp.ne.s32.totalorder %s460, %s463
      %p472 = scmp.eq.s32.totalorder %s41, 1
      %p473 = por %p471, %p472
      %p474 = scmp.ne.s32.totalorder %s463, %s464
      %p475 = scmp.eq.s32.totalorder %s41, 0
      %p476 = por %p474, %p475
      %p477 = scmp.ne.s32.totalorder %s463, %s464
      %p478 = scmp.eq.s32.totalorder %s42, 1
      %p479 = por %p477, %p478
      %p481 = scmp.ne.s32.totalorder %s464, %s480
      %p482 = scmp.eq.s32.totalorder %s42, 0
      %p483 = por %p481, %p482
      %p484 = scmp.le.s32.totalorder 1, %s36
      %p485 = scmp.lt.s32.totalorder %s36, 3
      %p486 = pnand %p484, %p485
      %p487 = pneg %p486
      // Predicated region
      $region9: #{tpu_custom_call.1} parent=5 // pred_check
        _
      $region10: #{tpu_custom_call.1} parent=5 // pred_check_branch
        %489 = sbr.rel (%p486) target = $region12
      $region11: #{tpu_custom_call.1} parent=5 // pred_region
        %s490 = ssub.s32 %s36, 1
        // Predicated region
        $region13: #{tpu_custom_call.1} parent=11 // pred_check
          %p491 = pneg %p135
        $region14: #{tpu_custom_call.1} parent=11 // pred_check_branch
          %493 = sbr.rel (%p491) target = $region16
        $region15: #{tpu_custom_call.1} parent=11 // pred_region
          %s495 = ssub.s32 2048, 2048
          %496 = vsyncadd [#allocation6], %s495
          %s497 = sshll.u32 [#allocation7], 4
          %s498 = int_to_ptr.vmem [resolvable:$true] %s497
          %503 = dma.hbm_to_vmem [thread:$0]  %s3, 2048, %s498, [#allocation6], 128, 128, 8
        $region16: #{tpu_custom_call.1} parent=11 // pred_fallthru
          _
        // Predicated region
        $region17: #{tpu_custom_call.1} parent=11 // pred_check
          %p504 = pneg %p156
        $region18: #{tpu_custom_call.1} parent=11 // pred_check_branch
          %506 = sbr.rel (%p504) target = $region20
        $region19: #{tpu_custom_call.1} parent=11 // pred_region
          _
        $region20: #{tpu_custom_call.1} parent=11 // pred_fallthru
          _
        // Predicated region
        $region21: #{tpu_custom_call.1} parent=11 // pred_check
          %p507 = pneg %p177
        $region22: #{tpu_custom_call.1} parent=11 // pred_check_branch
          %509 = sbr.rel (%p507) target = $region24
        $region23: #{tpu_custom_call.1} parent=11 // pred_region
          %s511 = ssub.s32 1024, 1024
          %512 = vsyncadd [#allocation9], %s511
          %s513 = sshll.u32 [#allocation8], 4
          %s514 = int_to_ptr.vmem [resolvable:$true] %s513
          %519 = dma.hbm_to_vmem [thread:$0]  %s5, 1024, %s514, [#allocation9], 64, 64, 4
        $region24: #{tpu_custom_call.1} parent=11 // pred_fallthru
          _
        // Predicated region
        $region25: #{tpu_custom_call.1} parent=11 // pred_check
          %p520 = pneg %p198
        $region26: #{tpu_custom_call.1} parent=11 // pred_check_branch
          %522 = sbr.rel (%p520) target = $region28
        $region27: #{tpu_custom_call.1} parent=11 // pred_region
          _
        $region28: #{tpu_custom_call.1} parent=11 // pred_fallthru
          _
        // Predicated region
        $region29: #{tpu_custom_call.1} parent=11 // pred_check
          %p523 = pneg %p219
        $region30: #{tpu_custom_call.1} parent=11 // pred_check_branch
          %525 = sbr.rel (%p523) target = $region32
        $region31: #{tpu_custom_call.1} parent=11 // pred_region
          %s527 = ssub.s32 1024, 1024
          %528 = vsyncadd [#allocation9], %s527
          %s529 = sshll.u32 [#allocation10], 4
          %s530 = int_to_ptr.vmem [resolvable:$true] %s529
          %535 = dma.hbm_to_vmem [thread:$0]  %s7, 1024, %s530, [#allocation9], 64, 64, 4
        $region32: #{tpu_custom_call.1} parent=11 // pred_fallthru
          _
        // Predicated region
        $region33: #{tpu_custom_call.1} parent=11 // pred_check
          %p536 = pneg %p240
        $region34: #{tpu_custom_call.1} parent=11 // pred_check_branch
          %538 = sbr.rel (%p536) target = $region36
        $region35: #{tpu_custom_call.1} parent=11 // pred_region
          _
        $region36: #{tpu_custom_call.1} parent=11 // pred_fallthru
          _
        // Predicated region
        $region37: #{tpu_custom_call.1} parent=11 // pred_check
          %p539 = pneg %p261
        $region38: #{tpu_custom_call.1} parent=11 // pred_check_branch
          %541 = sbr.rel (%p539) target = $region40
        $region39: #{tpu_custom_call.1} parent=11 // pred_region
          %s543 = ssub.s32 2048, 2048
          %544 = vsyncadd [#allocation12], %s543
          %s545 = sshll.u32 [#allocation11], 4
          %s546 = int_to_ptr.vmem [resolvable:$true] %s545
          %551 = dma.hbm_to_vmem [thread:$0]  %s9, 2048, %s546, [#allocation12], 128, 128, 8
        $region40: #{tpu_custom_call.1} parent=11 // pred_fallthru
          _
        // Predicated region
        $region41: #{tpu_custom_call.1} parent=11 // pred_check
          %p552 = pneg %p282
        $region42: #{tpu_custom_call.1} parent=11 // pred_check_branch
          %554 = sbr.rel (%p552) target = $region44
        $region43: #{tpu_custom_call.1} parent=11 // pred_region
          _
        $region44: #{tpu_custom_call.1} parent=11 // pred_fallthru
          _
        // Predicated region
        $region45: #{tpu_custom_call.1} parent=11 // pred_check
          %p555 = pneg %p303
        $region46: #{tpu_custom_call.1} parent=11 // pred_check_branch
          %557 = sbr.rel (%p555) target = $region48
        $region47: #{tpu_custom_call.1} parent=11 // pred_region
          %s559 = ssub.s32 2048, 2048
          %560 = vsyncadd [#allocation12], %s559
          %s561 = sshll.u32 [#allocation13], 4
          %s562 = int_to_ptr.vmem [resolvable:$true] %s561
          %567 = dma.hbm_to_vmem [thread:$0]  %s11, 2048, %s562, [#allocation12], 64, 64, 4
        $region48: #{tpu_custom_call.1} parent=11 // pred_fallthru
          _
        // Predicated region
        $region49: #{tpu_custom_call.1} parent=11 // pred_check
          %p568 = pneg %p324
        $region50: #{tpu_custom_call.1} parent=11 // pred_check_branch
          %570 = sbr.rel (%p568) target = $region52
        $region51: #{tpu_custom_call.1} parent=11 // pred_region
          _
        $region52: #{tpu_custom_call.1} parent=11 // pred_fallthru
          _
        // Predicated region
        $region53: #{tpu_custom_call.1} parent=11 // pred_check
          %p571 = pneg %p345
        $region54: #{tpu_custom_call.1} parent=11 // pred_check_branch
          %573 = sbr.rel (%p571) target = $region56
        $region55: #{tpu_custom_call.1} parent=11 // pred_region
          _
        $region56: #{tpu_custom_call.1} parent=11 // pred_fallthru
          _
        // Predicated region
        $region57: #{tpu_custom_call.1} parent=11 // pred_check
          %p574 = pneg %p366
        $region58: #{tpu_custom_call.1} parent=11 // pred_check_branch
          %576 = sbr.rel (%p574) target = $region60
        $region59: #{tpu_custom_call.1} parent=11 // pred_region
          _
        $region60: #{tpu_custom_call.1} parent=11 // pred_fallthru
          _
        // Predicated region
        $region61: #{tpu_custom_call.1} parent=11 // pred_check
          %p577 = pneg %p387
        $region62: #{tpu_custom_call.1} parent=11 // pred_check_branch
          %579 = sbr.rel (%p577) target = $region64
        $region63: #{tpu_custom_call.1} parent=11 // pred_region
          _
        $region64: #{tpu_custom_call.1} parent=11 // pred_fallthru
          _
        // Predicated region
        $region65: #{tpu_custom_call.1} parent=11 // pred_check
          %p580 = pneg %p408
        $region66: #{tpu_custom_call.1} parent=11 // pred_check_branch
          %582 = sbr.rel (%p580) target = $region68
        $region67: #{tpu_custom_call.1} parent=11 // pred_region
          _
        $region68: #{tpu_custom_call.1} parent=11 // pred_fallthru
          _
        // Predicated region
        $region69: #{tpu_custom_call.1} parent=11 // pred_check
          %p583 = pneg %p429
        $region70: #{tpu_custom_call.1} parent=11 // pred_check_branch
          %585 = sbr.rel (%p583) target = $region72
        $region71: #{tpu_custom_call.1} parent=11 // pred_region
          _
        $region72: #{tpu_custom_call.1} parent=11 // pred_fallthru
          _
        // Predicated region
        $region73: #{tpu_custom_call.1} parent=11 // pred_check
          %p586 = pneg %p450
        $region74: #{tpu_custom_call.1} parent=11 // pred_check_branch
          %588 = sbr.rel (%p586) target = $region76
        $region75: #{tpu_custom_call.1} parent=11 // pred_region
          _
        $region76: #{tpu_custom_call.1} parent=11 // pred_fallthru
          _
      $region12: #{tpu_custom_call.1} parent=5 // pred_fallthru
        _
      %p589 = scmp.lt.s32.totalorder %s36, 2
      // Predicated region
      $region77: #{tpu_custom_call.1} parent=5 // pred_check
        %p590 = pneg %p589
      $region78: #{tpu_custom_call.1} parent=5 // pred_check_branch
        %592 = sbr.rel (%p590) target = $region80
      $region79: #{tpu_custom_call.1} parent=5 // pred_region
        // Predicated region
        $region81: #{tpu_custom_call.1} parent=79 // pred_check
          %p593 = pneg %p56
        $region82: #{tpu_custom_call.1} parent=79 // pred_check_branch
          %595 = sbr.rel (%p593) target = $region84
        $region83: #{tpu_custom_call.1} parent=79 // pred_region
          %s596 = sand.u32 %s46, 1
          %s597 = scalar_lea.sflag [#allocation3], %s596
          %s598 = sand.u32 %s46, 1
          %s599 = smul.addr %s598, 16
          %s600 = scalar_lea.vmem [#allocation2], %s599
          %s602 = ssub.s32 256, 256
          %603 = vsyncadd %s597, %s602
          %s604 = smul.addr %s36, 2
          %s605 = smul.addr %s604, 128
          %s606 = scalar_lea.hbm %s0, %s605
          %s607 = sshll.u32 %s600, 4
          %s608 = int_to_ptr.vmem [resolvable:$true] %s607
          %613 = dma.hbm_to_vmem [thread:$0]  %s606, 256, %s608, %s597, 128, 128, 8
        $region84: #{tpu_custom_call.1} parent=79 // pred_fallthru
          _
        // Predicated region
        $region85: #{tpu_custom_call.1} parent=79 // pred_check
          %p614 = pneg %p82
        $region86: #{tpu_custom_call.1} parent=79 // pred_check_branch
          %616 = sbr.rel (%p614) target = $region88
        $region87: #{tpu_custom_call.1} parent=79 // pred_region
          %s617 = sand.u32 %s36, 1
          %s618 = scalar_lea.sflag [#allocation6], %s617
          %s619 = sand.u32 %s72, 1
          %s620 = smul.addr %s619, 16
          %s621 = scalar_lea.vmem [#allocation5], %s620
          %s623 = ssub.s32 256, 256
          %624 = vsyncadd %s618, %s623
          %s625 = smul.addr %s36, 2
          %s626 = smul.addr %s625, 128
          %s627 = scalar_lea.hbm %s1, %s626
          %s628 = sshll.u32 %s621, 4
          %s629 = int_to_ptr.vmem [resolvable:$true] %s628
          %634 = dma.hbm_to_vmem [thread:$0]  %s627, 256, %s629, %s618, 128, 128, 8
        $region88: #{tpu_custom_call.1} parent=79 // pred_fallthru
          _
        // Predicated region
        $region89: #{tpu_custom_call.1} parent=79 // pred_check
          %p635 = pneg %p108
        $region90: #{tpu_custom_call.1} parent=79 // pred_check_branch
          %637 = sbr.rel (%p635) target = $region92
        $region91: #{tpu_custom_call.1} parent=79 // pred_region
          %p638 = scmp.lt.s32.totalorder %s36, 1
          %s639 = scalar_select %p638, %s36, 1
          %s640 = scalar_lea.vmem %s2, %s639
        $region92: #{tpu_custom_call.1} parent=79 // pred_fallthru
          _
      $region80: #{tpu_custom_call.1} parent=5 // pred_fallthru
        _
      %p641 = scmp.le.s32.totalorder 1, %s36
      %p642 = scmp.lt.s32.totalorder %s36, 3
      %p643 = pnand %p641, %p642
      %p644 = pneg %p643
      // Predicated region
      $region93: #{tpu_custom_call.1} parent=5 // pred_check
        _
      $region94: #{tpu_custom_call.1} parent=5 // pred_check_branch
        %646 = sbr.rel (%p643) target = $region96
      $region95: #{tpu_custom_call.1} parent=5 // pred_region
        %s647 = ssub.s32 %s36, 1
        %s648 = sand.u32 %s49, 1
        %s649 = scalar_lea.sflag [#allocation3], %s648
        %s650 = sand.u32 %s49, 1
        %s651 = smul.addr %s650, 16
        %s652 = scalar_lea.vmem [#allocation2], %s651
        // Predicated region
        $region97: #{tpu_custom_call.1} parent=95 // pred_check
          %p653 = pneg %p62
        $region98: #{tpu_custom_call.1} parent=95 // pred_check_branch
          %655 = sbr.rel (%p653) target = $region100
        $region99: #{tpu_custom_call.1} parent=95 // pred_region
          %656 = dma.done %s649, 256
        $region100: #{tpu_custom_call.1} parent=95 // pred_fallthru
          _
        %s657 = sand.u32 %s41, 1
        %s658 = scalar_lea.sflag [#allocation6], %s657
        %s659 = sand.u32 %s75, 1
        %s660 = smul.addr %s659, 16
        %s661 = scalar_lea.vmem [#allocation5], %s660
        // Predicated region
        $region101: #{tpu_custom_call.1} parent=95 // pred_check
          %p662 = pneg %p88
        $region102: #{tpu_custom_call.1} parent=95 // pred_check_branch
          %664 = sbr.rel (%p662) target = $region104
        $region103: #{tpu_custom_call.1} parent=95 // pred_region
          %665 = dma.done %s658, 256
        $region104: #{tpu_custom_call.1} parent=95 // pred_fallthru
          _
        // Predicated region
        $region105: #{tpu_custom_call.1} parent=95 // pred_check
          %p666 = pneg %p135
        $region106: #{tpu_custom_call.1} parent=95 // pred_check_branch
          %668 = sbr.rel (%p666) target = $region108
        $region107: #{tpu_custom_call.1} parent=95 // pred_region
          %669 = dma.done [#allocation6], 2048
        $region108: #{tpu_custom_call.1} parent=95 // pred_fallthru
          _
        // Predicated region
        $region109: #{tpu_custom_call.1} parent=95 // pred_check
          %p670 = pneg %p177
        $region110: #{tpu_custom_call.1} parent=95 // pred_check_branch
          %672 = sbr.rel (%p670) target = $region112
        $region111: #{tpu_custom_call.1} parent=95 // pred_region
          %673 = dma.done [#allocation9], 1024
        $region112: #{tpu_custom_call.1} parent=95 // pred_fallthru
          _
        // Predicated region
        $region113: #{tpu_custom_call.1} parent=95 // pred_check
          %p674 = pneg %p219
        $region114: #{tpu_custom_call.1} parent=95 // pred_check_branch
          %676 = sbr.rel (%p674) target = $region116
        $region115: #{tpu_custom_call.1} parent=95 // pred_region
          %677 = dma.done [#allocation9], 1024
        $region116: #{tpu_custom_call.1} parent=95 // pred_fallthru
          _
        // Predicated region
        $region117: #{tpu_custom_call.1} parent=95 // pred_check
          %p678 = pneg %p261
        $region118: #{tpu_custom_call.1} parent=95 // pred_check_branch
          %680 = sbr.rel (%p678) target = $region120
        $region119: #{tpu_custom_call.1} parent=95 // pred_region
          %681 = dma.done [#allocation12], 2048
        $region120: #{tpu_custom_call.1} parent=95 // pred_fallthru
          _
        // Predicated region
        $region121: #{tpu_custom_call.1} parent=95 // pred_check
          %p682 = pneg %p303
        $region122: #{tpu_custom_call.1} parent=95 // pred_check_branch
          %684 = sbr.rel (%p682) target = $region124
        $region123: #{tpu_custom_call.1} parent=95 // pred_region
          %685 = dma.done [#allocation12], 2048
        $region124: #{tpu_custom_call.1} parent=95 // pred_fallthru
          _
        %s686 = sand.u32 %s49, 1
        %s687 = scalar_lea.sflag [#allocation3], %s686
        %s688 = sand.u32 %s49, 1
        %s689 = smul.addr %s688, 16
        %s690 = scalar_lea.vmem [#allocation2], %s689
        %p691 = pneg %p62
        %p692 = pneg %p59
        %s693 = sand.u32 %s41, 1
        %s694 = scalar_lea.sflag [#allocation6], %s693
        %s695 = sand.u32 %s75, 1
        %s696 = smul.addr %s695, 16
        %s697 = scalar_lea.vmem [#allocation5], %s696
        %p698 = pneg %p88
        %p699 = pneg %p85
        %p700 = scmp.lt.s32.totalorder %s41, 1
        %s701 = scalar_select %p700, %s41, 1
        %s702 = scalar_lea.vmem %s2, %s701
        %p703 = pneg %p114
        %p704 = pneg %p111
        %p705 = pneg %p135
        %p706 = pneg %p132
        %p707 = pneg %p156
        %p708 = pneg %p153
        %p709 = pneg %p177
        %p710 = pneg %p174
        %p711 = pneg %p198
        %p712 = pneg %p195
        %p713 = pneg %p219
        %p714 = pneg %p216
        %p715 = pneg %p240
        %p716 = pneg %p237
        %p717 = pneg %p261
        %p718 = pneg %p258
        %p719 = pneg %p282
        %p720 = pneg %p279
        %p721 = pneg %p303
        %p722 = pneg %p300
        %p723 = pneg %p324
        %p724 = pneg %p321
        %p725 = pneg %p345
        %p726 = pneg %p342
        %p727 = pneg %p366
        %p728 = pneg %p363
        %p729 = pneg %p387
        %p730 = pneg %p384
        %p731 = pneg %p408
        %p732 = pneg %p405
        %p733 = pneg %p429
        %p734 = pneg %p426
        %p735 = pneg %p450
        %p736 = pneg %p447
        %p737 = pneg %p476
        %p738 = pneg %p473
        %s739 = sand.u32 %s463, 1
        %s740 = scalar_lea.sflag [#allocation4], %s739
        %s741 = sand.u32 %s463, 1
        %s742 = smul.addr %s741, 16
        %s743 = scalar_lea.vmem [#allocation14], %s742
        %p744 = scmp.lt.s32.totalorder %s41, 1
        %s745 = scalar_select %p744, %s41, 1
        %s746 = scalar_lea.vmem %s2, %s745
        %v748 = vld [vmem:[%s652] sm:$0xff]
        %v749 = vld [vmem:[%s652 + $0x8] sm:$0xff]
        %v750 = vld [vmem:[%s661] sm:$0xff]
        %v751 = vld [vmem:[%s661 + $0x8] sm:$0xff]
        %v752 = vld [vmem:[%s746] sm:$0x1]
        %v753 = vadd.f32 %v748, %v750
        %v754 = vadd.f32 %v749, %v751
        %v755 = vpack.c.bf16 %v754, %v753
        %v756 = vpack.c.bf16 %v749, %v748
        %v757 = vld [vmem:[#allocation7] sm:$0xff]
        %v758 = vld [vmem:[#allocation7 + $0x8] sm:$0xff]
        %v759 = vld [vmem:[#allocation7 + $0x10] sm:$0xff]
        %v760 = vld [vmem:[#allocation7 + $0x18] sm:$0xff]
        %v761 = vld [vmem:[#allocation7 + $0x20] sm:$0xff]
        %v762 = vld [vmem:[#allocation7 + $0x28] sm:$0xff]
        %v763 = vld [vmem:[#allocation7 + $0x30] sm:$0xff]
        %v764 = vld [vmem:[#allocation7 + $0x38] sm:$0xff]
        %v765 = vld [vmem:[#allocation7 + $0x40] sm:$0xff]
        %v766 = vld [vmem:[#allocation7 + $0x48] sm:$0xff]
        %v767 = vld [vmem:[#allocation7 + $0x50] sm:$0xff]
        %v768 = vld [vmem:[#allocation7 + $0x58] sm:$0xff]
        %v769 = vld [vmem:[#allocation7 + $0x60] sm:$0xff]
        %v770 = vld [vmem:[#allocation7 + $0x68] sm:$0xff]
        %v771 = vld [vmem:[#allocation7 + $0x70] sm:$0xff]
        %v772 = vld [vmem:[#allocation7 + $0x78] sm:$0xff]
        %v773 = vld [vmem:[%s4] sm:$0x3]
        %v775 = vlaneseq
        %v776 = vshrl.u32 %v775, 7
        %v777 = vsub.s32 0, %v776
        %v778 = vrot.slane %v773, %v777
        %v779 = vlaneseq
        %v780 = vshrl.u32 %v779, 7
        %v781 = vsub.s32 1, %v780
        %v782 = vrot.slane %v773, %v781
        %v801 = vunpack.c.l.b16 %v757
        %v802 = vunpack.c.h.b16 %v757
        %v803 = vunpack.c.l.b16 %v758
        %v804 = vunpack.c.h.b16 %v758
        %v805 = vunpack.c.l.b16 %v759
        %v806 = vunpack.c.h.b16 %v759
        %v807 = vunpack.c.l.b16 %v760
        %v808 = vunpack.c.h.b16 %v760
        %v809 = vunpack.c.l.b16 %v761
        %v810 = vunpack.c.h.b16 %v761
        %v811 = vunpack.c.l.b16 %v762
        %v812 = vunpack.c.h.b16 %v762
        %v813 = vunpack.c.l.b16 %v763
        %v814 = vunpack.c.h.b16 %v763
        %v815 = vunpack.c.l.b16 %v764
        %v816 = vunpack.c.h.b16 %v764
        %v817 = vunpack.c.l.b16 %v765
        %v818 = vunpack.c.h.b16 %v765
        %v819 = vunpack.c.l.b16 %v766
        %v820 = vunpack.c.h.b16 %v766
        %v821 = vunpack.c.l.b16 %v767
        %v822 = vunpack.c.h.b16 %v767
        %v823 = vunpack.c.l.b16 %v768
        %v824 = vunpack.c.h.b16 %v768
        %v825 = vunpack.c.l.b16 %v769
        %v826 = vunpack.c.h.b16 %v769
        %v827 = vunpack.c.l.b16 %v770
        %v828 = vunpack.c.h.b16 %v770
        %v829 = vunpack.c.l.b16 %v771
        %v830 = vunpack.c.h.b16 %v771
        %v831 = vunpack.c.l.b16 %v772
        %v832 = vunpack.c.h.b16 %v772
        %v833 = vpack.c.b16 %v803, %v801
        %v834 = vpack.c.b16 %v804, %v802
        %v835 = vpack.c.b16 %v807, %v805
        %v836 = vpack.c.b16 %v808, %v806
        %v837 = vpack.c.b16 %v811, %v809
        %v838 = vpack.c.b16 %v812, %v810
        %v839 = vpack.c.b16 %v815, %v813
        %v840 = vpack.c.b16 %v816, %v814
        %v841 = vpack.c.b16 %v819, %v817
        %v842 = vpack.c.b16 %v820, %v818
        %v843 = vpack.c.b16 %v823, %v821
        %v844 = vpack.c.b16 %v824, %v822
        %v845 = vpack.c.b16 %v827, %v825
        %v846 = vpack.c.b16 %v828, %v826
        %v847 = vpack.c.b16 %v831, %v829
        %v848 = vpack.c.b16 %v832, %v830
        %865 = vmatprep.subr.bf16.mxu0 %v834
        %866 = vmatpush1.bf16.msra.mxu0 %v833
        %867 = vmatprep.subr.bf16.mxu0 %v836
        %868 = vmatpush1.bf16.msra.mxu0 %v835
        %869 = vmatprep.subr.bf16.mxu0 %v838
        %870 = vmatpush1.bf16.msra.mxu0 %v837
        %871 = vmatprep.subr.bf16.mxu0 %v840
        %872 = vmatpush1.bf16.msra.mxu0 %v839
        %873 = vmatprep.subr.bf16.mxu0 %v842
        %874 = vmatpush1.bf16.msra.mxu0 %v841
        %875 = vmatprep.subr.bf16.mxu0 %v844
        %876 = vmatpush1.bf16.msra.mxu0 %v843
        %877 = vmatprep.subr.bf16.mxu0 %v846
        %878 = vmatpush1.bf16.msra.mxu0 %v845
        %879 = vmatprep.subr.bf16.mxu0 %v848
        %880 = vmatpush1.bf16.msra.mxu0 %v847
        %881 = vmatprep.subr.bf16.mxu0 0
        %882 = vmatpush1.bf16.msra.mxu0 0
        %883 = vmatprep.subr.bf16.mxu0 0
        %884 = vmatpush1.bf16.msra.mxu0 0
        %885 = vmatprep.subr.bf16.mxu0 0
        %886 = vmatpush1.bf16.msra.mxu0 0
        %887 = vmatprep.subr.bf16.mxu0 0
        %888 = vmatpush1.bf16.msra.mxu0 0
        %889 = vmatprep.subr.bf16.mxu0 0
        %890 = vmatpush1.bf16.msra.mxu0 0
        %891 = vmatprep.subr.bf16.mxu0 0
        %892 = vmatpush1.bf16.msra.mxu0 0
        %893 = vmatprep.subr.bf16.mxu0 0
        %894 = vmatpush1.bf16.msra.mxu0 0
        %895 = vmatprep.subr.bf16.mxu0 0
        %896 = vmatpush1.bf16.msra.mxu0 0
        %897 = vmatprep.mubr.bf16.mxu0 0
        %898 = vmatmul.mubr.bf16.gmra.mrb[0].mxu0 %v755
        %v899 = vpop.f32.mrb[0].mxu0
        %v900 = vadd.f32 %v778, %v899
        %v901 = vpop.f32.mrb[0].mxu0
        %v902 = vadd.f32 %v782, %v901
        %v903 = vpop.f32.mrb[0].mxu0
        %v904 = vadd.f32 %v778, %v903
        %v905 = vpop.f32.mrb[0].mxu0
        %v906 = vadd.f32 %v782, %v905
        %907 = vdwg.mxu0
        %v908 = vmul.f32 %v900, 0.17677669
        %v909 = vmul.f32 %v904, 0.17677669
        %v910 = vld [vmem:[#allocation8] sm:$0xf]
        %v911 = vld [vmem:[#allocation8 + $0x4] sm:$0xf]
        %v912 = vld [vmem:[#allocation8 + $0x8] sm:$0xf]
        %v913 = vld [vmem:[#allocation8 + $0xc] sm:$0xf]
        %v914 = vld [vmem:[#allocation8 + $0x10] sm:$0xf]
        %v915 = vld [vmem:[#allocation8 + $0x14] sm:$0xf]
        %v916 = vld [vmem:[#allocation8 + $0x18] sm:$0xf]
        %v917 = vld [vmem:[#allocation8 + $0x1c] sm:$0xf]
        %v918 = vld [vmem:[#allocation8 + $0x20] sm:$0xf]
        %v919 = vld [vmem:[#allocation8 + $0x24] sm:$0xf]
        %v920 = vld [vmem:[#allocation8 + $0x28] sm:$0xf]
        %v921 = vld [vmem:[#allocation8 + $0x2c] sm:$0xf]
        %v922 = vld [vmem:[#allocation8 + $0x30] sm:$0xf]
        %v923 = vld [vmem:[#allocation8 + $0x34] sm:$0xf]
        %v924 = vld [vmem:[#allocation8 + $0x38] sm:$0xf]
        %v925 = vld [vmem:[#allocation8 + $0x3c] sm:$0xf]
        %v926 = vld [vmem:[%s6] sm:$0x1]
        %v928 = vlaneseq
        %v929 = vshrl.u32 %v928, 7
        %v930 = vsub.s32 0, %v929
        %v931 = vrot.slane %v926, %v930
        %v949 = vunpack.c.l.b16 %v910
        %v950 = vunpack.c.l.b16 %v911
        %v951 = vunpack.c.l.b16 %v912
        %v952 = vunpack.c.l.b16 %v913
        %v953 = vunpack.c.l.b16 %v914
        %v954 = vunpack.c.l.b16 %v915
        %v955 = vunpack.c.l.b16 %v916
        %v956 = vunpack.c.l.b16 %v917
        %v957 = vunpack.c.l.b16 %v918
        %v958 = vunpack.c.l.b16 %v919
        %v959 = vunpack.c.l.b16 %v920
        %v960 = vunpack.c.l.b16 %v921
        %v961 = vunpack.c.l.b16 %v922
        %v962 = vunpack.c.l.b16 %v923
        %v963 = vunpack.c.l.b16 %v924
        %v964 = vunpack.c.l.b16 %v925
        %v965 = vpack.c.b16 %v950, %v949
        %v966 = vpack.c.b16 %v952, %v951
        %v967 = vpack.c.b16 %v954, %v953
        %v968 = vpack.c.b16 %v956, %v955
        %v969 = vpack.c.b16 %v958, %v957
        %v970 = vpack.c.b16 %v960, %v959
        %v971 = vpack.c.b16 %v962, %v961
        %v972 = vpack.c.b16 %v964, %v963
        %981 = vmatprep.subr.bf16.mxu0 0
        %982 = vmatpush1.bf16.msra.mxu0 %v965
        %983 = vmatprep.subr.bf16.mxu0 0
        %984 = vmatpush1.bf16.msra.mxu0 %v966
        %985 = vmatprep.subr.bf16.mxu0 0
        %986 = vmatpush1.bf16.msra.mxu0 %v967
        %987 = vmatprep.subr.bf16.mxu0 0
        %988 = vmatpush1.bf16.msra.mxu0 %v968
        %989 = vmatprep.subr.bf16.mxu0 0
        %990 = vmatpush1.bf16.msra.mxu0 %v969
        %991 = vmatprep.subr.bf16.mxu0 0
        %992 = vmatpush1.bf16.msra.mxu0 %v970
        %993 = vmatprep.subr.bf16.mxu0 0
        %994 = vmatpush1.bf16.msra.mxu0 %v971
        %995 = vmatprep.subr.bf16.mxu0 0
        %996 = vmatpush1.bf16.msra.mxu0 %v972
        %997 = vmatprep.subr.bf16.mxu0 0
        %998 = vmatpush1.bf16.msra.mxu0 0
        %999 = vmatprep.subr.bf16.mxu0 0
        %1000 = vmatpush1.bf16.msra.mxu0 0
        %1001 = vmatprep.subr.bf16.mxu0 0
        %1002 = vmatpush1.bf16.msra.mxu0 0
        %1003 = vmatprep.subr.bf16.mxu0 0
        %1004 = vmatpush1.bf16.msra.mxu0 0
        %1005 = vmatprep.subr.bf16.mxu0 0
        %1006 = vmatpush1.bf16.msra.mxu0 0
        %1007 = vmatprep.subr.bf16.mxu0 0
        %1008 = vmatpush1.bf16.msra.mxu0 0
        %1009 = vmatprep.subr.bf16.mxu0 0
        %1010 = vmatpush1.bf16.msra.mxu0 0
        %1011 = vmatprep.subr.bf16.mxu0 0
        %1012 = vmatpush1.bf16.msra.mxu0 0
        %1013 = vmatprep.mubr.bf16.mxu0 0
        %1014 = vmatmul.mubr.bf16.gmra.mrb[0].mxu0 %v756
        %v1015 = vpop.f32.mrb[0].mxu0
        %v1016 = vadd.f32 %v931, %v1015
        %v1017 = vpop.f32.mrb[0].mxu0
        %v1018 = vpop.f32.mrb[0].mxu0
        %v1019 = vadd.f32 %v931, %v1018
        %v1020 = vpop.f32.mrb[0].mxu0
        %1021 = vdwg.mxu0
        %v1022 = vpack.c.bf16 %v909, %v908
        %v1023 = vpack.c.bf16 %v906, %v902
        %v1024 = vpack.c.bf16 %v1019, %v1016
        %v1026 = vlaneseq
        %v1027 = vshrl.u32 %v1026, 7
        %v1028 = vsub.s32 0, %v1027
        %v1029 = vrot.slane %v752, %v1028
        %vm1031 = vcmask 261120
        %v1033 = vsel %vm1031, %v1022, 0
        %v1036 = vsel %vm1031, %v1023, 0
        %1038 = vmatprep.subr.bf16.mxu0 0
        %1039 = vmatpush1.bf16.xpose.msra.mxu0 %v1036
        %1040 = vmatprep.subr.bf16.mxu0 0
        %1041 = vmatpush1.bf16.xpose.msra.mxu0 0
        %1042 = vmatprep.subr.bf16.mxu0 0
        %1043 = vmatpush1.bf16.xpose.msra.mxu0 0
        %1044 = vmatprep.subr.bf16.mxu0 0
        %1045 = vmatpush1.bf16.xpose.msra.mxu0 0
        %1046 = vmatprep.subr.bf16.mxu0 0
        %1047 = vmatpush1.bf16.xpose.msra.mxu0 0
        %1048 = vmatprep.subr.bf16.mxu0 0
        %1049 = vmatpush1.bf16.xpose.msra.mxu0 0
        %1050 = vmatprep.subr.bf16.mxu0 0
        %1051 = vmatpush1.bf16.xpose.msra.mxu0 0
        %1052 = vmatprep.subr.bf16.mxu0 0
        %1053 = vmatpush1.bf16.xpose.msra.mxu0 0
        %1054 = vmatprep.subr.bf16.mxu0 0
        %1055 = vmatpush1.bf16.xpose.msra.mxu0 0
        %1056 = vmatprep.subr.bf16.mxu0 0
        %1057 = vmatpush1.bf16.xpose.msra.mxu0 0
        %1058 = vmatprep.subr.bf16.mxu0 0
        %1059 = vmatpush1.bf16.xpose.msra.mxu0 0
        %1060 = vmatprep.subr.bf16.mxu0 0
        %1061 = vmatpush1.bf16.xpose.msra.mxu0 0
        %1062 = vmatprep.subr.bf16.mxu0 0
        %1063 = vmatpush1.bf16.xpose.msra.mxu0 0
        %1064 = vmatprep.subr.bf16.mxu0 0
        %1065 = vmatpush1.bf16.xpose.msra.mxu0 0
        %1066 = vmatprep.subr.bf16.mxu0 0
        %1067 = vmatpush1.bf16.xpose.msra.mxu0 0
        %1068 = vmatprep.subr.bf16.mxu0 0
        %1069 = vmatpush1.bf16.xpose.msra.mxu0 0
        %1070 = vmatprep.mubr.bf16.mxu0 0
        %1071 = vmatmul.mubr.bf16.gmra.mrb[0].mxu0 %v1033
        %v1072 = vpop.f32.mrb[0].mxu0
        %v1073 = vadd.f32 %v1029, %v1072
        %v1074 = vpop.f32.mrb[0].mxu0
        %v1075 = vpop.f32.mrb[0].mxu0
        %v1076 = vadd.f32 %v1029, %v1075
        %v1077 = vpop.f32.mrb[0].mxu0
        %1078 = vdwg.mxu0
        %vm1079 = vcmask 130048
        %v1080 = vsel %vm1079, %v1073, -inf
        %1081 = vmax.xlane.f32.xlu0 %v1080
        %v1082 = vpop.xlane.xlu0 %1081
        %v1083 = vsel %vm1079, %v1076, -inf
        %1084 = vmax.xlane.f32.xlu0 %v1083
        %v1085 = vpop.xlane.xlu0 %1084
        %v1086 = vsub.f32 %v1073, %v1082
        %v1087 = vsub.f32 %v1076, %v1085
        %v1088 = vmul.f32 %v1086, 1.442695
        %v1089 = vpow.pop %v1088
        %v1090 = vmul.f32 %v1087, 1.442695
        %v1091 = vpow.pop %v1090
        %v1092 = vsel %vm1079, %v1089, 0.0
        %1093 = vadd.xlane.f32.xlu0 %v1092
        %v1094 = vpop.xlane.xlu0 %1093
        %v1095 = vsel %vm1079, %v1091, 0.0
        %1096 = vadd.xlane.f32.xlu0 %v1095
        %v1097 = vpop.xlane.xlu0 %1096
        %v1098 = vrcp.pop %v1094
        %v1099 = vrcp.pop %v1097
        %v1100 = vmul.f32 %v1089, %v1098
        %v1101 = vmul.f32 %v1091, %v1099
        %v1102 = vpack.c.bf16 %v1101, %v1100
        %v1104 = vsel %vm1079, %v1102, 0
        %1106 = vmatprep.subr.bf16.mxu0 0
        %1107 = vmatpush1.bf16.msra.mxu0 %v1024
        %1108 = vmatprep.subr.bf16.mxu0 0
        %1109 = vmatpush1.bf16.msra.mxu0 0
        %1110 = vmatprep.subr.bf16.mxu0 0
        %1111 = vmatpush1.bf16.msra.mxu0 0
        %1112 = vmatprep.subr.bf16.mxu0 0
        %1113 = vmatpush1.bf16.msra.mxu0 0
        %1114 = vmatprep.subr.bf16.mxu0 0
        %1115 = vmatpush1.bf16.msra.mxu0 0
        %1116 = vmatprep.subr.bf16.mxu0 0
        %1117 = vmatpush1.bf16.msra.mxu0 0
        %1118 = vmatprep.subr.bf16.mxu0 0
        %1119 = vmatpush1.bf16.msra.mxu0 0
        %1120 = vmatprep.subr.bf16.mxu0 0
        %1121 = vmatpush1.bf16.msra.mxu0 0
        %1122 = vmatprep.subr.bf16.mxu0 0
        %1123 = vmatpush1.bf16.msra.mxu0 0
        %1124 = vmatprep.subr.bf16.mxu0 0
        %1125 = vmatpush1.bf16.msra.mxu0 0
        %1126 = vmatprep.subr.bf16.mxu0 0
        %1127 = vmatpush1.bf16.msra.mxu0 0
        %1128 = vmatprep.subr.bf16.mxu0 0
        %1129 = vmatpush1.bf16.msra.mxu0 0
        %1130 = vmatprep.subr.bf16.mxu0 0
        %1131 = vmatpush1.bf16.msra.mxu0 0
        %1132 = vmatprep.subr.bf16.mxu0 0
        %1133 = vmatpush1.bf16.msra.mxu0 0
        %1134 = vmatprep.subr.bf16.mxu0 0
        %1135 = vmatpush1.bf16.msra.mxu0 0
        %1136 = vmatprep.subr.bf16.mxu0 0
        %1137 = vmatpush1.bf16.msra.mxu0 0
        %1138 = vmatprep.mubr.bf16.mxu0 0
        %1139 = vmatmul.mubr.bf16.gmra.mrb[0].mxu0 %v1104
        %v1140 = vpop.f32.mrb[0].mxu0
        %v1141 = vadd.f32 0.0, %v1140
        %v1142 = vpop.f32.mrb[0].mxu0
        %v1143 = vpop.f32.mrb[0].mxu0
        %v1144 = vadd.f32 0.0, %v1143
        %v1145 = vpop.f32.mrb[0].mxu0
        %1146 = vdwg.mxu0
        %1148 = vrot.lane.b32.xlu0 %v1022, 96
        %v1149 = vpop.permute.xlu0 %1148
        %1151 = vrot.lane.b32.xlu0 %v1023, 96
        %v1152 = vpop.permute.xlu0 %1151
        %v1154 = vsel %vm1031, %v1149, 0
        %v1157 = vsel %vm1031, %v1152, 0
        %1159 = vmatprep.subr.bf16.mxu0 0
        %1160 = vmatpush1.bf16.xpose.msra.mxu0 %v1157
        %1161 = vmatprep.subr.bf16.mxu0 0
        %1162 = vmatpush1.bf16.xpose.msra.mxu0 0
        %1163 = vmatprep.subr.bf16.mxu0 0
        %1164 = vmatpush1.bf16.xpose.msra.mxu0 0
        %1165 = vmatprep.subr.bf16.mxu0 0
        %1166 = vmatpush1.bf16.xpose.msra.mxu0 0
        %1167 = vmatprep.subr.bf16.mxu0 0
        %1168 = vmatpush1.bf16.xpose.msra.mxu0 0
        %1169 = vmatprep.subr.bf16.mxu0 0
        %1170 = vmatpush1.bf16.xpose.msra.mxu0 0
        %1171 = vmatprep.subr.bf16.mxu0 0
        %1172 = vmatpush1.bf16.xpose.msra.mxu0 0
        %1173 = vmatprep.subr.bf16.mxu0 0
        %1174 = vmatpush1.bf16.xpose.msra.mxu0 0
        %1175 = vmatprep.subr.bf16.mxu0 0
        %1176 = vmatpush1.bf16.xpose.msra.mxu0 0
        %1177 = vmatprep.subr.bf16.mxu0 0
        %1178 = vmatpush1.bf16.xpose.msra.mxu0 0
        %1179 = vmatprep.subr.bf16.mxu0 0
        %1180 = vmatpush1.bf16.xpose.msra.mxu0 0
        %1181 = vmatprep.subr.bf16.mxu0 0
        %1182 = vmatpush1.bf16.xpose.msra.mxu0 0
        %1183 = vmatprep.subr.bf16.mxu0 0
        %1184 = vmatpush1.bf16.xpose.msra.mxu0 0
        %1185 = vmatprep.subr.bf16.mxu0 0
        %1186 = vmatpush1.bf16.xpose.msra.mxu0 0
        %1187 = vmatprep.subr.bf16.mxu0 0
        %1188 = vmatpush1.bf16.xpose.msra.mxu0 0
        %1189 = vmatprep.subr.bf16.mxu0 0
        %1190 = vmatpush1.bf16.xpose.msra.mxu0 0
        %1191 = vmatprep.mubr.bf16.mxu0 0
        %1192 = vmatmul.mubr.bf16.gmra.mrb[0].mxu0 %v1154
        %v1193 = vpop.f32.mrb[0].mxu0
        %v1194 = vadd.f32 %v1029, %v1193
        %v1195 = vpop.f32.mrb[0].mxu0
        %v1196 = vpop.f32.mrb[0].mxu0
        %v1197 = vadd.f32 %v1029, %v1196
        %v1198 = vpop.f32.mrb[0].mxu0
        %1199 = vdwg.mxu0
        %v1200 = vsel %vm1079, %v1194, -inf
        %1201 = vmax.xlane.f32.xlu0 %v1200
        %v1202 = vpop.xlane.xlu0 %1201
        %v1203 = vsel %vm1079, %v1197, -inf
        %1204 = vmax.xlane.f32.xlu0 %v1203
        %v1205 = vpop.xlane.xlu0 %1204
        %v1206 = vsub.f32 %v1194, %v1202
        %v1207 = vsub.f32 %v1197, %v1205
        %v1208 = vmul.f32 %v1206, 1.442695
        %v1209 = vpow.pop %v1208
        %v1210 = vmul.f32 %v1207, 1.442695
        %v1211 = vpow.pop %v1210
        %v1212 = vsel %vm1079, %v1209, 0.0
        %1213 = vadd.xlane.f32.xlu0 %v1212
        %v1214 = vpop.xlane.xlu0 %1213
        %v1215 = vsel %vm1079, %v1211, 0.0
        %1216 = vadd.xlane.f32.xlu0 %v1215
        %v1217 = vpop.xlane.xlu0 %1216
        %v1218 = vrcp.pop %v1214
        %v1219 = vrcp.pop %v1217
        %v1220 = vmul.f32 %v1209, %v1218
        %v1221 = vmul.f32 %v1211, %v1219
        %v1222 = vpack.c.bf16 %v1221, %v1220
        %1224 = vrot.lane.b32.xlu0 %v1024, 96
        %v1225 = vpop.permute.xlu0 %1224
        %v1228 = vsel %vm1079, %v1222, 0
        %1230 = vmatprep.subr.bf16.mxu0 0
        %1231 = vmatpush1.bf16.msra.mxu0 %v1225
        %1232 = vmatprep.subr.bf16.mxu0 0
        %1233 = vmatpush1.bf16.msra.mxu0 0
        %1234 = vmatprep.subr.bf16.mxu0 0
        %1235 = vmatpush1.bf16.msra.mxu0 0
        %1236 = vmatprep.subr.bf16.mxu0 0
        %1237 = vmatpush1.bf16.msra.mxu0 0
        %1238 = vmatprep.subr.bf16.mxu0 0
        %1239 = vmatpush1.bf16.msra.mxu0 0
        %1240 = vmatprep.subr.bf16.mxu0 0
        %1241 = vmatpush1.bf16.msra.mxu0 0
        %1242 = vmatprep.subr.bf16.mxu0 0
        %1243 = vmatpush1.bf16.msra.mxu0 0
        %1244 = vmatprep.subr.bf16.mxu0 0
        %1245 = vmatpush1.bf16.msra.mxu0 0
        %1246 = vmatprep.subr.bf16.mxu0 0
        %1247 = vmatpush1.bf16.msra.mxu0 0
        %1248 = vmatprep.subr.bf16.mxu0 0
        %1249 = vmatpush1.bf16.msra.mxu0 0
        %1250 = vmatprep.subr.bf16.mxu0 0
        %1251 = vmatpush1.bf16.msra.mxu0 0
        %1252 = vmatprep.subr.bf16.mxu0 0
        %1253 = vmatpush1.bf16.msra.mxu0 0
        %1254 = vmatprep.subr.bf16.mxu0 0
        %1255 = vmatpush1.bf16.msra.mxu0 0
        %1256 = vmatprep.subr.bf16.mxu0 0
        %1257 = vmatpush1.bf16.msra.mxu0 0
        %1258 = vmatprep.subr.bf16.mxu0 0
        %1259 = vmatpush1.bf16.msra.mxu0 0
        %1260 = vmatprep.subr.bf16.mxu0 0
        %1261 = vmatpush1.bf16.msra.mxu0 0
        %1262 = vmatprep.mubr.bf16.mxu0 0
        %1263 = vmatmul.mubr.bf16.gmra.mrb[0].mxu0 %v1228
        %v1264 = vpop.f32.mrb[0].mxu0
        %v1265 = vadd.f32 0.0, %v1264
        %v1266 = vpop.f32.mrb[0].mxu0
        %v1267 = vpop.f32.mrb[0].mxu0
        %v1268 = vadd.f32 0.0, %v1267
        %v1269 = vpop.f32.mrb[0].mxu0
        %1270 = vdwg.mxu0
        %1271 = vrot.lane.b32.xlu0 %v1022, 64
        %v1272 = vpop.permute.xlu0 %1271
        %1273 = vrot.lane.b32.xlu0 %v1023, 64
        %v1274 = vpop.permute.xlu0 %1273
        %v1276 = vsel %vm1031, %v1272, 0
        %v1279 = vsel %vm1031, %v1274, 0
        %1281 = vmatprep.subr.bf16.mxu0 0
        %1282 = vmatpush1.bf16.xpose.msra.mxu0 %v1279
        %1283 = vmatprep.subr.bf16.mxu0 0
        %1284 = vmatpush1.bf16.xpose.msra.mxu0 0
        %1285 = vmatprep.subr.bf16.mxu0 0
        %1286 = vmatpush1.bf16.xpose.msra.mxu0 0
        %1287 = vmatprep.subr.bf16.mxu0 0
        %1288 = vmatpush1.bf16.xpose.msra.mxu0 0
        %1289 = vmatprep.subr.bf16.mxu0 0
        %1290 = vmatpush1.bf16.xpose.msra.mxu0 0
        %1291 = vmatprep.subr.bf16.mxu0 0
        %1292 = vmatpush1.bf16.xpose.msra.mxu0 0
        %1293 = vmatprep.subr.bf16.mxu0 0
        %1294 = vmatpush1.bf16.xpose.msra.mxu0 0
        %1295 = vmatprep.subr.bf16.mxu0 0
        %1296 = vmatpush1.bf16.xpose.msra.mxu0 0
        %1297 = vmatprep.subr.bf16.mxu0 0
        %1298 = vmatpush1.bf16.xpose.msra.mxu0 0
        %1299 = vmatprep.subr.bf16.mxu0 0
        %1300 = vmatpush1.bf16.xpose.msra.mxu0 0
        %1301 = vmatprep.subr.bf16.mxu0 0
        %1302 = vmatpush1.bf16.xpose.msra.mxu0 0
        %1303 = vmatprep.subr.bf16.mxu0 0
        %1304 = vmatpush1.bf16.xpose.msra.mxu0 0
        %1305 = vmatprep.subr.bf16.mxu0 0
        %1306 = vmatpush1.bf16.xpose.msra.mxu0 0
        %1307 = vmatprep.subr.bf16.mxu0 0
        %1308 = vmatpush1.bf16.xpose.msra.mxu0 0
        %1309 = vmatprep.subr.bf16.mxu0 0
        %1310 = vmatpush1.bf16.xpose.msra.mxu0 0
        %1311 = vmatprep.subr.bf16.mxu0 0
        %1312 = vmatpush1.bf16.xpose.msra.mxu0 0
        %1313 = vmatprep.mubr.bf16.mxu0 0
        %1314 = vmatmul.mubr.bf16.gmra.mrb[0].mxu0 %v1276
        %v1315 = vpop.f32.mrb[0].mxu0
        %v1316 = vadd.f32 %v1029, %v1315
        %v1317 = vpop.f32.mrb[0].mxu0
        %v1318 = vpop.f32.mrb[0].mxu0
        %v1319 = vadd.f32 %v1029, %v1318
        %v1320 = vpop.f32.mrb[0].mxu0
        %1321 = vdwg.mxu0
        %v1322 = vsel %vm1079, %v1316, -inf
        %1323 = vmax.xlane.f32.xlu0 %v1322
        %v1324 = vpop.xlane.xlu0 %1323
        %v1325 = vsel %vm1079, %v1319, -inf
        %1326 = vmax.xlane.f32.xlu0 %v1325
        %v1327 = vpop.xlane.xlu0 %1326
        %v1328 = vsub.f32 %v1316, %v1324
        %v1329 = vsub.f32 %v1319, %v1327
        %v1330 = vmul.f32 %v1328, 1.442695
        %v1331 = vpow.pop %v1330
        %v1332 = vmul.f32 %v1329, 1.442695
        %v1333 = vpow.pop %v1332
        %v1334 = vsel %vm1079, %v1331, 0.0
        %1335 = vadd.xlane.f32.xlu0 %v1334
        %v1336 = vpop.xlane.xlu0 %1335
        %v1337 = vsel %vm1079, %v1333, 0.0
        %1338 = vadd.xlane.f32.xlu0 %v1337
        %v1339 = vpop.xlane.xlu0 %1338
        %v1340 = vrcp.pop %v1336
        %v1341 = vrcp.pop %v1339
        %v1342 = vmul.f32 %v1331, %v1340
        %v1343 = vmul.f32 %v1333, %v1341
        %v1344 = vpack.c.bf16 %v1343, %v1342
        %1345 = vrot.lane.b32.xlu0 %v1024, 64
        %v1346 = vpop.permute.xlu0 %1345
        %v1349 = vsel %vm1079, %v1344, 0
        %1351 = vmatprep.subr.bf16.mxu0 0
        %1352 = vmatpush1.bf16.msra.mxu0 %v1346
        %1353 = vmatprep.subr.bf16.mxu0 0
        %1354 = vmatpush1.bf16.msra.mxu0 0
        %1355 = vmatprep.subr.bf16.mxu0 0
        %1356 = vmatpush1.bf16.msra.mxu0 0
        %1357 = vmatprep.subr.bf16.mxu0 0
        %1358 = vmatpush1.bf16.msra.mxu0 0
        %1359 = vmatprep.subr.bf16.mxu0 0
        %1360 = vmatpush1.bf16.msra.mxu0 0
        %1361 = vmatprep.subr.bf16.mxu0 0
        %1362 = vmatpush1.bf16.msra.mxu0 0
        %1363 = vmatprep.subr.bf16.mxu0 0
        %1364 = vmatpush1.bf16.msra.mxu0 0
        %1365 = vmatprep.subr.bf16.mxu0 0
        %1366 = vmatpush1.bf16.msra.mxu0 0
        %1367 = vmatprep.subr.bf16.mxu0 0
        %1368 = vmatpush1.bf16.msra.mxu0 0
        %1369 = vmatprep.subr.bf16.mxu0 0
        %1370 = vmatpush1.bf16.msra.mxu0 0
        %1371 = vmatprep.subr.bf16.mxu0 0
        %1372 = vmatpush1.bf16.msra.mxu0 0
        %1373 = vmatprep.subr.bf16.mxu0 0
        %1374 = vmatpush1.bf16.msra.mxu0 0
        %1375 = vmatprep.subr.bf16.mxu0 0
        %1376 = vmatpush1.bf16.msra.mxu0 0
        %1377 = vmatprep.subr.bf16.mxu0 0
        %1378 = vmatpush1.bf16.msra.mxu0 0
        %1379 = vmatprep.subr.bf16.mxu0 0
        %1380 = vmatpush1.bf16.msra.mxu0 0
        %1381 = vmatprep.subr.bf16.mxu0 0
        %1382 = vmatpush1.bf16.msra.mxu0 0
        %1383 = vmatprep.mubr.bf16.mxu0 0
        %1384 = vmatmul.mubr.bf16.gmra.mrb[0].mxu0 %v1349
        %v1385 = vpop.f32.mrb[0].mxu0
        %v1386 = vadd.f32 0.0, %v1385
        %v1387 = vpop.f32.mrb[0].mxu0
        %v1388 = vpop.f32.mrb[0].mxu0
        %v1389 = vadd.f32 0.0, %v1388
        %v1390 = vpop.f32.mrb[0].mxu0
        %1391 = vdwg.mxu0
        %1392 = vrot.lane.b32.xlu0 %v1022, 32
        %v1393 = vpop.permute.xlu0 %1392
        %1394 = vrot.lane.b32.xlu0 %v1023, 32
        %v1395 = vpop.permute.xlu0 %1394
        %v1397 = vsel %vm1031, %v1393, 0
        %v1400 = vsel %vm1031, %v1395, 0
        %1402 = vmatprep.subr.bf16.mxu0 0
        %1403 = vmatpush1.bf16.xpose.msra.mxu0 %v1400
        %1404 = vmatprep.subr.bf16.mxu0 0
        %1405 = vmatpush1.bf16.xpose.msra.mxu0 0
        %1406 = vmatprep.subr.bf16.mxu0 0
        %1407 = vmatpush1.bf16.xpose.msra.mxu0 0
        %1408 = vmatprep.subr.bf16.mxu0 0
        %1409 = vmatpush1.bf16.xpose.msra.mxu0 0
        %1410 = vmatprep.subr.bf16.mxu0 0
        %1411 = vmatpush1.bf16.xpose.msra.mxu0 0
        %1412 = vmatprep.subr.bf16.mxu0 0
        %1413 = vmatpush1.bf16.xpose.msra.mxu0 0
        %1414 = vmatprep.subr.bf16.mxu0 0
        %1415 = vmatpush1.bf16.xpose.msra.mxu0 0
        %1416 = vmatprep.subr.bf16.mxu0 0
        %1417 = vmatpush1.bf16.xpose.msra.mxu0 0
        %1418 = vmatprep.subr.bf16.mxu0 0
        %1419 = vmatpush1.bf16.xpose.msra.mxu0 0
        %1420 = vmatprep.subr.bf16.mxu0 0
        %1421 = vmatpush1.bf16.xpose.msra.mxu0 0
        %1422 = vmatprep.subr.bf16.mxu0 0
        %1423 = vmatpush1.bf16.xpose.msra.mxu0 0
        %1424 = vmatprep.subr.bf16.mxu0 0
        %1425 = vmatpush1.bf16.xpose.msra.mxu0 0
        %1426 = vmatprep.subr.bf16.mxu0 0
        %1427 = vmatpush1.bf16.xpose.msra.mxu0 0
        %1428 = vmatprep.subr.bf16.mxu0 0
        %1429 = vmatpush1.bf16.xpose.msra.mxu0 0
        %1430 = vmatprep.subr.bf16.mxu0 0
        %1431 = vmatpush1.bf16.xpose.msra.mxu0 0
        %1432 = vmatprep.subr.bf16.mxu0 0
        %1433 = vmatpush1.bf16.xpose.msra.mxu0 0
        %1434 = vmatprep.mubr.bf16.mxu0 0
        %1435 = vmatmul.mubr.bf16.gmra.mrb[0].mxu0 %v1397
        %v1436 = vpop.f32.mrb[0].mxu0
        %v1437 = vadd.f32 %v1029, %v1436
        %v1438 = vpop.f32.mrb[0].mxu0
        %v1439 = vpop.f32.mrb[0].mxu0
        %v1440 = vadd.f32 %v1029, %v1439
        %v1441 = vpop.f32.mrb[0].mxu0
        %1442 = vdwg.mxu0
        %v1443 = vsel %vm1079, %v1437, -inf
        %1444 = vmax.xlane.f32.xlu0 %v1443
        %v1445 = vpop.xlane.xlu0 %1444
        %v1446 = vsel %vm1079, %v1440, -inf
        %1447 = vmax.xlane.f32.xlu0 %v1446
        %v1448 = vpop.xlane.xlu0 %1447
        %v1449 = vsub.f32 %v1437, %v1445
        %v1450 = vsub.f32 %v1440, %v1448
        %v1451 = vmul.f32 %v1449, 1.442695
        %v1452 = vpow.pop %v1451
        %v1453 = vmul.f32 %v1450, 1.442695
        %v1454 = vpow.pop %v1453
        %v1455 = vsel %vm1079, %v1452, 0.0
        %1456 = vadd.xlane.f32.xlu0 %v1455
        %v1457 = vpop.xlane.xlu0 %1456
        %v1458 = vsel %vm1079, %v1454, 0.0
        %1459 = vadd.xlane.f32.xlu0 %v1458
        %v1460 = vpop.xlane.xlu0 %1459
        %v1461 = vrcp.pop %v1457
        %v1462 = vrcp.pop %v1460
        %v1463 = vmul.f32 %v1452, %v1461
        %v1464 = vmul.f32 %v1454, %v1462
        %v1465 = vpack.c.bf16 %v1464, %v1463
        %1466 = vrot.lane.b32.xlu0 %v1024, 32
        %v1467 = vpop.permute.xlu0 %1466
        %v1470 = vsel %vm1079, %v1465, 0
        %1472 = vmatprep.subr.bf16.mxu0 0
        %1473 = vmatpush1.bf16.msra.mxu0 %v1467
        %1474 = vmatprep.subr.bf16.mxu0 0
        %1475 = vmatpush1.bf16.msra.mxu0 0
        %1476 = vmatprep.subr.bf16.mxu0 0
        %1477 = vmatpush1.bf16.msra.mxu0 0
        %1478 = vmatprep.subr.bf16.mxu0 0
        %1479 = vmatpush1.bf16.msra.mxu0 0
        %1480 = vmatprep.subr.bf16.mxu0 0
        %1481 = vmatpush1.bf16.msra.mxu0 0
        %1482 = vmatprep.subr.bf16.mxu0 0
        %1483 = vmatpush1.bf16.msra.mxu0 0
        %1484 = vmatprep.subr.bf16.mxu0 0
        %1485 = vmatpush1.bf16.msra.mxu0 0
        %1486 = vmatprep.subr.bf16.mxu0 0
        %1487 = vmatpush1.bf16.msra.mxu0 0
        %1488 = vmatprep.subr.bf16.mxu0 0
        %1489 = vmatpush1.bf16.msra.mxu0 0
        %1490 = vmatprep.subr.bf16.mxu0 0
        %1491 = vmatpush1.bf16.msra.mxu0 0
        %1492 = vmatprep.subr.bf16.mxu0 0
        %1493 = vmatpush1.bf16.msra.mxu0 0
        %1494 = vmatprep.subr.bf16.mxu0 0
        %1495 = vmatpush1.bf16.msra.mxu0 0
        %1496 = vmatprep.subr.bf16.mxu0 0
        %1497 = vmatpush1.bf16.msra.mxu0 0
        %1498 = vmatprep.subr.bf16.mxu0 0
        %1499 = vmatpush1.bf16.msra.mxu0 0
        %1500 = vmatprep.subr.bf16.mxu0 0
        %1501 = vmatpush1.bf16.msra.mxu0 0
        %1502 = vmatprep.subr.bf16.mxu0 0
        %1503 = vmatpush1.bf16.msra.mxu0 0
        %1504 = vmatprep.mubr.bf16.mxu0 0
        %1505 = vmatmul.mubr.bf16.gmra.mrb[0].mxu0 %v1470
        %v1506 = vpop.f32.mrb[0].mxu0
        %v1507 = vadd.f32 0.0, %v1506
        %v1508 = vpop.f32.mrb[0].mxu0
        %v1509 = vpop.f32.mrb[0].mxu0
        %v1510 = vadd.f32 0.0, %v1509
        %v1511 = vpop.f32.mrb[0].mxu0
        %1512 = vdwg.mxu0
        %1515 = vrot.lane.b32.xlu0 %v1265, 32
        %v1516 = vpop.permute.xlu0 %1515
        %1517 = vrot.lane.b32.xlu0 %v1268, 32
        %v1518 = vpop.permute.xlu0 %1517
        %1523 = vrot.lane.b32.xlu0 %v1386, 64
        %v1524 = vpop.permute.xlu0 %1523
        %1525 = vrot.lane.b32.xlu0 %v1389, 64
        %v1526 = vpop.permute.xlu0 %1525
        %1531 = vrot.lane.b32.xlu0 %v1507, 96
        %v1532 = vpop.permute.xlu0 %1531
        %1533 = vrot.lane.b32.xlu0 %v1510, 96
        %v1534 = vpop.permute.xlu0 %1533
        %v1537 = vsel %vm1031, %v1141, %v1516
        %v1538 = vsel %vm1031, %v1144, %v1518
        %vm1539 = vcmask 523264
        %v1540 = vsel %vm1539, %v1537, %v1524
        %v1541 = vsel %vm1539, %v1538, %v1526
        %vm1542 = vcmask 785408
        %v1543 = vsel %vm1542, %v1540, %v1532
        %v1544 = vsel %vm1542, %v1541, %v1534
        %v1545 = vpack.c.bf16 %v1544, %v1543
        %v1546 = vld [vmem:[#allocation10] sm:$0xf]
        %v1547 = vld [vmem:[#allocation10 + $0x4] sm:$0xf]
        %v1548 = vld [vmem:[#allocation10 + $0x8] sm:$0xf]
        %v1549 = vld [vmem:[#allocation10 + $0xc] sm:$0xf]
        %v1550 = vld [vmem:[#allocation10 + $0x10] sm:$0xf]
        %v1551 = vld [vmem:[#allocation10 + $0x14] sm:$0xf]
        %v1552 = vld [vmem:[#allocation10 + $0x18] sm:$0xf]
        %v1553 = vld [vmem:[#allocation10 + $0x1c] sm:$0xf]
        %v1554 = vld [vmem:[#allocation10 + $0x20] sm:$0xf]
        %v1555 = vld [vmem:[#allocation10 + $0x24] sm:$0xf]
        %v1556 = vld [vmem:[#allocation10 + $0x28] sm:$0xf]
        %v1557 = vld [vmem:[#allocation10 + $0x2c] sm:$0xf]
        %v1558 = vld [vmem:[#allocation10 + $0x30] sm:$0xf]
        %v1559 = vld [vmem:[#allocation10 + $0x34] sm:$0xf]
        %v1560 = vld [vmem:[#allocation10 + $0x38] sm:$0xf]
        %v1561 = vld [vmem:[#allocation10 + $0x3c] sm:$0xf]
        %v1562 = vld [vmem:[%s8] sm:$0x1]
        %v1564 = vlaneseq
        %v1565 = vshrl.u32 %v1564, 7
        %v1566 = vsub.s32 0, %v1565
        %v1567 = vrot.slane %v1562, %v1566
        %v1585 = vunpack.c.l.b16 %v1546
        %v1586 = vunpack.c.l.b16 %v1547
        %v1587 = vunpack.c.l.b16 %v1548
        %v1588 = vunpack.c.l.b16 %v1549
        %v1589 = vunpack.c.l.b16 %v1550
        %v1590 = vunpack.c.l.b16 %v1551
        %v1591 = vunpack.c.l.b16 %v1552
        %v1592 = vunpack.c.l.b16 %v1553
        %v1593 = vunpack.c.l.b16 %v1554
        %v1594 = vunpack.c.l.b16 %v1555
        %v1595 = vunpack.c.l.b16 %v1556
        %v1596 = vunpack.c.l.b16 %v1557
        %v1597 = vunpack.c.l.b16 %v1558
        %v1598 = vunpack.c.l.b16 %v1559
        %v1599 = vunpack.c.l.b16 %v1560
        %v1600 = vunpack.c.l.b16 %v1561
        %v1601 = vpack.c.b16 %v1586, %v1585
        %v1602 = vpack.c.b16 %v1588, %v1587
        %v1603 = vpack.c.b16 %v1590, %v1589
        %v1604 = vpack.c.b16 %v1592, %v1591
        %v1605 = vpack.c.b16 %v1594, %v1593
        %v1606 = vpack.c.b16 %v1596, %v1595
        %v1607 = vpack.c.b16 %v1598, %v1597
        %v1608 = vpack.c.b16 %v1600, %v1599
        %1617 = vmatprep.subr.bf16.mxu0 0
        %1618 = vmatpush1.bf16.msra.mxu0 %v1601
        %1619 = vmatprep.subr.bf16.mxu0 0
        %1620 = vmatpush1.bf16.msra.mxu0 %v1602
        %1621 = vmatprep.subr.bf16.mxu0 0
        %1622 = vmatpush1.bf16.msra.mxu0 %v1603
        %1623 = vmatprep.subr.bf16.mxu0 0
        %1624 = vmatpush1.bf16.msra.mxu0 %v1604
        %1625 = vmatprep.subr.bf16.mxu0 0
        %1626 = vmatpush1.bf16.msra.mxu0 %v1605
        %1627 = vmatprep.subr.bf16.mxu0 0
        %1628 = vmatpush1.bf16.msra.mxu0 %v1606
        %1629 = vmatprep.subr.bf16.mxu0 0
        %1630 = vmatpush1.bf16.msra.mxu0 %v1607
        %1631 = vmatprep.subr.bf16.mxu0 0
        %1632 = vmatpush1.bf16.msra.mxu0 %v1608
        %1633 = vmatprep.subr.bf16.mxu0 0
        %1634 = vmatpush1.bf16.msra.mxu0 0
        %1635 = vmatprep.subr.bf16.mxu0 0
        %1636 = vmatpush1.bf16.msra.mxu0 0
        %1637 = vmatprep.subr.bf16.mxu0 0
        %1638 = vmatpush1.bf16.msra.mxu0 0
        %1639 = vmatprep.subr.bf16.mxu0 0
        %1640 = vmatpush1.bf16.msra.mxu0 0
        %1641 = vmatprep.subr.bf16.mxu0 0
        %1642 = vmatpush1.bf16.msra.mxu0 0
        %1643 = vmatprep.subr.bf16.mxu0 0
        %1644 = vmatpush1.bf16.msra.mxu0 0
        %1645 = vmatprep.subr.bf16.mxu0 0
        %1646 = vmatpush1.bf16.msra.mxu0 0
        %1647 = vmatprep.subr.bf16.mxu0 0
        %1648 = vmatpush1.bf16.msra.mxu0 0
        %1649 = vmatprep.mubr.bf16.mxu0 0
        %1650 = vmatmul.mubr.bf16.gmra.mrb[0].mxu0 %v1545
        %v1651 = vpop.f32.mrb[0].mxu0
        %v1652 = vadd.f32 %v1567, %v1651
        %v1653 = vpop.f32.mrb[0].mxu0
        %v1654 = vpop.f32.mrb[0].mxu0
        %v1655 = vadd.f32 %v1567, %v1654
        %v1656 = vpop.f32.mrb[0].mxu0
        %1657 = vdwg.mxu0
        %v1658 = vadd.f32 %v748, %v1652
        %v1659 = vadd.f32 %v749, %v1655
        %v1660 = vld [vmem:[%s13] sm:$0x1]
        %v1661 = vld [vmem:[%s14] sm:$0x1]
        %1662 = vadd.xlane.f32.xlu0 %v1658
        %v1663 = vpop.xlane.xlu0 %1662
        %1664 = vadd.xlane.f32.xlu0 %v1659
        %v1665 = vpop.xlane.xlu0 %1664
        %v1666 = vrcp.pop 128.0
        %v1667 = vmul.f32 %v1663, %v1666
        %v1668 = vmul.f32 %v1665, %v1666
        %v1669 = vsub.f32 %v1658, %v1667
        %v1670 = vsub.f32 %v1659, %v1668
        %v1671 = vmul.f32 %v1669, %v1669
        %v1672 = vmul.f32 %v1670, %v1670
        %1673 = vadd.xlane.f32.xlu0 %v1671
        %v1674 = vpop.xlane.xlu0 %1673
        %1675 = vadd.xlane.f32.xlu0 %v1672
        %v1676 = vpop.xlane.xlu0 %1675
        %v1677 = vmul.f32 %v1674, %v1666
        %v1678 = vmul.f32 %v1676, %v1666
        %v1679 = vadd.f32 %v1677, 1e-05
        %v1680 = vadd.f32 %v1678, 1e-05
        %v1681 = vrsqrt.pop %v1679
        %v1682 = vrsqrt.pop %v1680
        %v1683 = vmul.f32 %v1669, %v1681
        %v1684 = vmul.f32 %v1670, %v1682
        %v1686 = vlaneseq
        %v1687 = vshrl.u32 %v1686, 7
        %v1688 = vsub.s32 0, %v1687
        %v1689 = vrot.slane %v1660, %v1688
        %v1691 = vmul.f32 %v1683, %v1689
        %v1692 = vmul.f32 %v1684, %v1689
        %v1694 = vlaneseq
        %v1695 = vshrl.u32 %v1694, 7
        %v1696 = vsub.s32 0, %v1695
        %v1697 = vrot.slane %v1661, %v1696
        %v1699 = vadd.f32 %v1691, %v1697
        %v1700 = vadd.f32 %v1692, %v1697
        %v1701 = vpack.c.bf16 %v1700, %v1699
        %v1702 = vld [vmem:[#allocation11] sm:$0xff]
        %v1703 = vld [vmem:[#allocation11 + $0x8] sm:$0xff]
        %v1704 = vld [vmem:[#allocation11 + $0x10] sm:$0xff]
        %v1705 = vld [vmem:[#allocation11 + $0x18] sm:$0xff]
        %v1706 = vld [vmem:[#allocation11 + $0x20] sm:$0xff]
        %v1707 = vld [vmem:[#allocation11 + $0x28] sm:$0xff]
        %v1708 = vld [vmem:[#allocation11 + $0x30] sm:$0xff]
        %v1709 = vld [vmem:[#allocation11 + $0x38] sm:$0xff]
        %v1710 = vld [vmem:[#allocation11 + $0x40] sm:$0xff]
        %v1711 = vld [vmem:[#allocation11 + $0x48] sm:$0xff]
        %v1712 = vld [vmem:[#allocation11 + $0x50] sm:$0xff]
        %v1713 = vld [vmem:[#allocation11 + $0x58] sm:$0xff]
        %v1714 = vld [vmem:[#allocation11 + $0x60] sm:$0xff]
        %v1715 = vld [vmem:[#allocation11 + $0x68] sm:$0xff]
        %v1716 = vld [vmem:[#allocation11 + $0x70] sm:$0xff]
        %v1717 = vld [vmem:[#allocation11 + $0x78] sm:$0xff]
        %v1718 = vld [vmem:[%s10] sm:$0x3]
        %v1720 = vlaneseq
        %v1721 = vshrl.u32 %v1720, 7
        %v1722 = vsub.s32 0, %v1721
        %v1723 = vrot.slane %v1718, %v1722
        %v1724 = vlaneseq
        %v1725 = vshrl.u32 %v1724, 7
        %v1726 = vsub.s32 1, %v1725
        %v1727 = vrot.slane %v1718, %v1726
        %v1746 = vunpack.c.l.b16 %v1702
        %v1747 = vunpack.c.h.b16 %v1702
        %v1748 = vunpack.c.l.b16 %v1703
        %v1749 = vunpack.c.h.b16 %v1703
        %v1750 = vunpack.c.l.b16 %v1704
        %v1751 = vunpack.c.h.b16 %v1704
        %v1752 = vunpack.c.l.b16 %v1705
        %v1753 = vunpack.c.h.b16 %v1705
        %v1754 = vunpack.c.l.b16 %v1706
        %v1755 = vunpack.c.h.b16 %v1706
        %v1756 = vunpack.c.l.b16 %v1707
        %v1757 = vunpack.c.h.b16 %v1707
        %v1758 = vunpack.c.l.b16 %v1708
        %v1759 = vunpack.c.h.b16 %v1708
        %v1760 = vunpack.c.l.b16 %v1709
        %v1761 = vunpack.c.h.b16 %v1709
        %v1762 = vunpack.c.l.b16 %v1710
        %v1763 = vunpack.c.h.b16 %v1710
        %v1764 = vunpack.c.l.b16 %v1711
        %v1765 = vunpack.c.h.b16 %v1711
        %v1766 = vunpack.c.l.b16 %v1712
        %v1767 = vunpack.c.h.b16 %v1712
        %v1768 = vunpack.c.l.b16 %v1713
        %v1769 = vunpack.c.h.b16 %v1713
        %v1770 = vunpack.c.l.b16 %v1714
        %v1771 = vunpack.c.h.b16 %v1714
        %v1772 = vunpack.c.l.b16 %v1715
        %v1773 = vunpack.c.h.b16 %v1715
        %v1774 = vunpack.c.l.b16 %v1716
        %v1775 = vunpack.c.h.b16 %v1716
        %v1776 = vunpack.c.l.b16 %v1717
        %v1777 = vunpack.c.h.b16 %v1717
        %v1778 = vpack.c.b16 %v1748, %v1746
        %v1779 = vpack.c.b16 %v1749, %v1747
        %v1780 = vpack.c.b16 %v1752, %v1750
        %v1781 = vpack.c.b16 %v1753, %v1751
        %v1782 = vpack.c.b16 %v1756, %v1754
        %v1783 = vpack.c.b16 %v1757, %v1755
        %v1784 = vpack.c.b16 %v1760, %v1758
        %v1785 = vpack.c.b16 %v1761, %v1759
        %v1786 = vpack.c.b16 %v1764, %v1762
        %v1787 = vpack.c.b16 %v1765, %v1763
        %v1788 = vpack.c.b16 %v1768, %v1766
        %v1789 = vpack.c.b16 %v1769, %v1767
        %v1790 = vpack.c.b16 %v1772, %v1770
        %v1791 = vpack.c.b16 %v1773, %v1771
        %v1792 = vpack.c.b16 %v1776, %v1774
        %v1793 = vpack.c.b16 %v1777, %v1775
        %1810 = vmatprep.subr.bf16.mxu0 %v1779
        %1811 = vmatpush1.bf16.msra.mxu0 %v1778
        %1812 = vmatprep.subr.bf16.mxu0 %v1781
        %1813 = vmatpush1.bf16.msra.mxu0 %v1780
        %1814 = vmatprep.subr.bf16.mxu0 %v1783
        %1815 = vmatpush1.bf16.msra.mxu0 %v1782
        %1816 = vmatprep.subr.bf16.mxu0 %v1785
        %1817 = vmatpush1.bf16.msra.mxu0 %v1784
        %1818 = vmatprep.subr.bf16.mxu0 %v1787
        %1819 = vmatpush1.bf16.msra.mxu0 %v1786
        %1820 = vmatprep.subr.bf16.mxu0 %v1789
        %1821 = vmatpush1.bf16.msra.mxu0 %v1788
        %1822 = vmatprep.subr.bf16.mxu0 %v1791
        %1823 = vmatpush1.bf16.msra.mxu0 %v1790
        %1824 = vmatprep.subr.bf16.mxu0 %v1793
        %1825 = vmatpush1.bf16.msra.mxu0 %v1792
        %1826 = vmatprep.subr.bf16.mxu0 0
        %1827 = vmatpush1.bf16.msra.mxu0 0
        %1828 = vmatprep.subr.bf16.mxu0 0
        %1829 = vmatpush1.bf16.msra.mxu0 0
        %1830 = vmatprep.subr.bf16.mxu0 0
        %1831 = vmatpush1.bf16.msra.mxu0 0
        %1832 = vmatprep.subr.bf16.mxu0 0
        %1833 = vmatpush1.bf16.msra.mxu0 0
        %1834 = vmatprep.subr.bf16.mxu0 0
        %1835 = vmatpush1.bf16.msra.mxu0 0
        %1836 = vmatprep.subr.bf16.mxu0 0
        %1837 = vmatpush1.bf16.msra.mxu0 0
        %1838 = vmatprep.subr.bf16.mxu0 0
        %1839 = vmatpush1.bf16.msra.mxu0 0
        %1840 = vmatprep.subr.bf16.mxu0 0
        %1841 = vmatpush1.bf16.msra.mxu0 0
        %1842 = vmatprep.mubr.bf16.mxu0 0
        %1843 = vmatmul.mubr.bf16.gmra.mrb[0].mxu0 %v1701
        %v1844 = vpop.f32.mrb[0].mxu0
        %v1845 = vadd.f32 %v1723, %v1844
        %v1846 = vpop.f32.mrb[0].mxu0
        %v1847 = vadd.f32 %v1727, %v1846
        %v1848 = vpop.f32.mrb[0].mxu0
        %v1849 = vadd.f32 %v1723, %v1848
        %v1850 = vpop.f32.mrb[0].mxu0
        %v1851 = vadd.f32 %v1727, %v1850
        %1852 = vdwg.mxu0
        %v1853 = vmax.f32 %v1845, 0.0
        %v1854 = vmax.f32 %v1847, 0.0
        %v1855 = vmax.f32 %v1849, 0.0
        %v1856 = vmax.f32 %v1851, 0.0
        %v1857 = vpack.c.bf16 %v1855, %v1853
        %v1858 = vpack.c.bf16 %v1856, %v1854
        %v1859 = vld [vmem:[#allocation13] sm:$0xf]
        %v1860 = vld [vmem:[#allocation13 + $0x4] sm:$0xf]
        %v1861 = vld [vmem:[#allocation13 + $0x8] sm:$0xf]
        %v1862 = vld [vmem:[#allocation13 + $0xc] sm:$0xf]
        %v1863 = vld [vmem:[#allocation13 + $0x10] sm:$0xf]
        %v1864 = vld [vmem:[#allocation13 + $0x14] sm:$0xf]
        %v1865 = vld [vmem:[#allocation13 + $0x18] sm:$0xf]
        %v1866 = vld [vmem:[#allocation13 + $0x1c] sm:$0xf]
        %v1867 = vld [vmem:[#allocation13 + $0x20] sm:$0xf]
        %v1868 = vld [vmem:[#allocation13 + $0x24] sm:$0xf]
        %v1869 = vld [vmem:[#allocation13 + $0x28] sm:$0xf]
        %v1870 = vld [vmem:[#allocation13 + $0x2c] sm:$0xf]
        %v1871 = vld [vmem:[#allocation13 + $0x30] sm:$0xf]
        %v1872 = vld [vmem:[#allocation13 + $0x34] sm:$0xf]
        %v1873 = vld [vmem:[#allocation13 + $0x38] sm:$0xf]
        %v1874 = vld [vmem:[#allocation13 + $0x3c] sm:$0xf]
        %v1875 = vld [vmem:[#allocation13 + $0x40] sm:$0xf]
        %v1876 = vld [vmem:[#allocation13 + $0x44] sm:$0xf]
        %v1877 = vld [vmem:[#allocation13 + $0x48] sm:$0xf]
        %v1878 = vld [vmem:[#allocation13 + $0x4c] sm:$0xf]
        %v1879 = vld [vmem:[#allocation13 + $0x50] sm:$0xf]
        %v1880 = vld [vmem:[#allocation13 + $0x54] sm:$0xf]
        %v1881 = vld [vmem:[#allocation13 + $0x58] sm:$0xf]
        %v1882 = vld [vmem:[#allocation13 + $0x5c] sm:$0xf]
        %v1883 = vld [vmem:[#allocation13 + $0x60] sm:$0xf]
        %v1884 = vld [vmem:[#allocation13 + $0x64] sm:$0xf]
        %v1885 = vld [vmem:[#allocation13 + $0x68] sm:$0xf]
        %v1886 = vld [vmem:[#allocation13 + $0x6c] sm:$0xf]
        %v1887 = vld [vmem:[#allocation13 + $0x70] sm:$0xf]
        %v1888 = vld [vmem:[#allocation13 + $0x74] sm:$0xf]
        %v1889 = vld [vmem:[#allocation13 + $0x78] sm:$0xf]
        %v1890 = vld [vmem:[#allocation13 + $0x7c] sm:$0xf]
        %v1891 = vld [vmem:[%s12] sm:$0x1]
        %v1893 = vlaneseq
        %v1894 = vshrl.u32 %v1893, 7
        %v1895 = vsub.s32 0, %v1894
        %v1896 = vrot.slane %v1891, %v1895
        %v1930 = vunpack.c.l.b16 %v1859
        %v1931 = vunpack.c.l.b16 %v1860
        %v1932 = vunpack.c.l.b16 %v1861
        %v1933 = vunpack.c.l.b16 %v1862
        %v1934 = vunpack.c.l.b16 %v1863
        %v1935 = vunpack.c.l.b16 %v1864
        %v1936 = vunpack.c.l.b16 %v1865
        %v1937 = vunpack.c.l.b16 %v1866
        %v1938 = vunpack.c.l.b16 %v1867
        %v1939 = vunpack.c.l.b16 %v1868
        %v1940 = vunpack.c.l.b16 %v1869
        %v1941 = vunpack.c.l.b16 %v1870
        %v1942 = vunpack.c.l.b16 %v1871
        %v1943 = vunpack.c.l.b16 %v1872
        %v1944 = vunpack.c.l.b16 %v1873
        %v1945 = vunpack.c.l.b16 %v1874
        %v1946 = vunpack.c.l.b16 %v1875
        %v1947 = vunpack.c.l.b16 %v1876
        %v1948 = vunpack.c.l.b16 %v1877
        %v1949 = vunpack.c.l.b16 %v1878
        %v1950 = vunpack.c.l.b16 %v1879
        %v1951 = vunpack.c.l.b16 %v1880
        %v1952 = vunpack.c.l.b16 %v1881
        %v1953 = vunpack.c.l.b16 %v1882
        %v1954 = vunpack.c.l.b16 %v1883
        %v1955 = vunpack.c.l.b16 %v1884
        %v1956 = vunpack.c.l.b16 %v1885
        %v1957 = vunpack.c.l.b16 %v1886
        %v1958 = vunpack.c.l.b16 %v1887
        %v1959 = vunpack.c.l.b16 %v1888
        %v1960 = vunpack.c.l.b16 %v1889
        %v1961 = vunpack.c.l.b16 %v1890
        %v1962 = vpack.c.b16 %v1931, %v1930
        %v1963 = vpack.c.b16 %v1933, %v1932
        %v1964 = vpack.c.b16 %v1935, %v1934
        %v1965 = vpack.c.b16 %v1937, %v1936
        %v1966 = vpack.c.b16 %v1939, %v1938
        %v1967 = vpack.c.b16 %v1941, %v1940
        %v1968 = vpack.c.b16 %v1943, %v1942
        %v1969 = vpack.c.b16 %v1945, %v1944
        %v1970 = vpack.c.b16 %v1947, %v1946
        %v1971 = vpack.c.b16 %v1949, %v1948
        %v1972 = vpack.c.b16 %v1951, %v1950
        %v1973 = vpack.c.b16 %v1953, %v1952
        %v1974 = vpack.c.b16 %v1955, %v1954
        %v1975 = vpack.c.b16 %v1957, %v1956
        %v1976 = vpack.c.b16 %v1959, %v1958
        %v1977 = vpack.c.b16 %v1961, %v1960
        %1994 = vmatprep.subr.bf16.mxu0 0
        %1995 = vmatpush1.bf16.msra.mxu0 %v1962
        %1996 = vmatprep.subr.bf16.mxu0 0
        %1997 = vmatpush1.bf16.msra.mxu0 %v1963
        %1998 = vmatprep.subr.bf16.mxu0 0
        %1999 = vmatpush1.bf16.msra.mxu0 %v1964
        %2000 = vmatprep.subr.bf16.mxu0 0
        %2001 = vmatpush1.bf16.msra.mxu0 %v1965
        %2002 = vmatprep.subr.bf16.mxu0 0
        %2003 = vmatpush1.bf16.msra.mxu0 %v1966
        %2004 = vmatprep.subr.bf16.mxu0 0
        %2005 = vmatpush1.bf16.msra.mxu0 %v1967
        %2006 = vmatprep.subr.bf16.mxu0 0
        %2007 = vmatpush1.bf16.msra.mxu0 %v1968
        %2008 = vmatprep.subr.bf16.mxu0 0
        %2009 = vmatpush1.bf16.msra.mxu0 %v1969
        %2010 = vmatprep.subr.bf16.mxu0 0
        %2011 = vmatpush1.bf16.msra.mxu0 %v1970
        %2012 = vmatprep.subr.bf16.mxu0 0
        %2013 = vmatpush1.bf16.msra.mxu0 %v1971
        %2014 = vmatprep.subr.bf16.mxu0 0
        %2015 = vmatpush1.bf16.msra.mxu0 %v1972
        %2016 = vmatprep.subr.bf16.mxu0 0
        %2017 = vmatpush1.bf16.msra.mxu0 %v1973
        %2018 = vmatprep.subr.bf16.mxu0 0
        %2019 = vmatpush1.bf16.msra.mxu0 %v1974
        %2020 = vmatprep.subr.bf16.mxu0 0
        %2021 = vmatpush1.bf16.msra.mxu0 %v1975
        %2022 = vmatprep.subr.bf16.mxu0 0
        %2023 = vmatpush1.bf16.msra.mxu0 %v1976
        %2024 = vmatprep.subr.bf16.mxu0 0
        %2025 = vmatpush1.bf16.msra.mxu0 %v1977
        %2026 = vmatprep.mubr.bf16.mxu0 %v1858
        %2027 = vmatmul.mubr.bf16.gmra.mrb[0].mxu0 %v1857
        %v2028 = vpop.f32.mrb[0].mxu0
        %v2029 = vadd.f32 %v1896, %v2028
        %v2030 = vpop.f32.mrb[0].mxu0
        %v2031 = vpop.f32.mrb[0].mxu0
        %v2032 = vadd.f32 %v1896, %v2031
        %v2033 = vpop.f32.mrb[0].mxu0
        %2034 = vdwg.mxu0
        %v2035 = vadd.f32 %v1699, %v2029
        %v2036 = vadd.f32 %v1700, %v2032
        %v2037 = vld [vmem:[%s15] sm:$0x1]
        %v2038 = vld [vmem:[%s16] sm:$0x1]
        %2039 = vadd.xlane.f32.xlu0 %v2035
        %v2040 = vpop.xlane.xlu0 %2039
        %2041 = vadd.xlane.f32.xlu0 %v2036
        %v2042 = vpop.xlane.xlu0 %2041
        %v2043 = vmul.f32 %v2040, %v1666
        %v2044 = vmul.f32 %v2042, %v1666
        %v2045 = vsub.f32 %v2035, %v2043
        %v2046 = vsub.f32 %v2036, %v2044
        %v2047 = vmul.f32 %v2045, %v2045
        %v2048 = vmul.f32 %v2046, %v2046
        %2049 = vadd.xlane.f32.xlu0 %v2047
        %v2050 = vpop.xlane.xlu0 %2049
        %2051 = vadd.xlane.f32.xlu0 %v2048
        %v2052 = vpop.xlane.xlu0 %2051
        %v2053 = vmul.f32 %v2050, %v1666
        %v2054 = vmul.f32 %v2052, %v1666
        %v2055 = vadd.f32 %v2053, 1e-05
        %v2056 = vadd.f32 %v2054, 1e-05
        %v2057 = vrsqrt.pop %v2055
        %v2058 = vrsqrt.pop %v2056
        %v2059 = vmul.f32 %v2045, %v2057
        %v2060 = vmul.f32 %v2046, %v2058
        %v2062 = vlaneseq
        %v2063 = vshrl.u32 %v2062, 7
        %v2064 = vsub.s32 0, %v2063
        %v2065 = vrot.slane %v2037, %v2064
        %v2067 = vmul.f32 %v2059, %v2065
        %v2068 = vmul.f32 %v2060, %v2065
        %v2070 = vlaneseq
        %v2071 = vshrl.u32 %v2070, 7
        %v2072 = vsub.s32 0, %v2071
        %v2073 = vrot.slane %v2038, %v2072
        %v2075 = vadd.f32 %v2067, %v2073
        %v2076 = vadd.f32 %v2068, %v2073
        %2077 = vst [vmem:[%s743] sm:$0xff] %v2075
        %2078 = vst [vmem:[%s743 + $0x8] sm:$0xff] %v2076
        %s2079 = sand.u32 %s463, 1
        %s2080 = scalar_lea.sflag [#allocation4], %s2079
        %s2081 = sand.u32 %s463, 1
        %s2082 = smul.addr %s2081, 16
        %s2083 = scalar_lea.vmem [#allocation14], %s2082
        // Predicated region
        $region125: #{tpu_custom_call.1} parent=95 // pred_check
          %p2084 = pneg %p473
        $region126: #{tpu_custom_call.1} parent=95 // pred_check_branch
          %2086 = sbr.rel (%p2084) target = $region128
        $region127: #{tpu_custom_call.1} parent=95 // pred_region
          %s2088 = ssub.s32 256, 256
          %2089 = vsyncadd %s2080, %s2088
          %s2090 = smul.addr %s41, 2
          %s2091 = smul.addr %s2090, 128
          %s2092 = scalar_lea.hbm %s19, %s2091
          %s2093 = sshll.u32 %s2083, 4
          %s2094 = int_to_ptr.vmem [resolvable:$true] %s2093
          %2099 = dma.vmem_to_hbm [thread:$0]  %s2094, 256, %s2092, %s2080, 128, 128, 8
        $region128: #{tpu_custom_call.1} parent=95 // pred_fallthru
          _
      $region96: #{tpu_custom_call.1} parent=5 // pred_fallthru
        _
      %p2100 = scmp.le.s32.totalorder 2, %s36
      // Predicated region
      $region129: #{tpu_custom_call.1} parent=5 // pred_check
        %p2101 = pneg %p2100
      $region130: #{tpu_custom_call.1} parent=5 // pred_check_branch
        %2103 = sbr.rel (%p2101) target = $region132
      $region131: #{tpu_custom_call.1} parent=5 // pred_region
        %s2104 = ssub.s32 %s36, 2
        // Predicated region
        $region133: #{tpu_custom_call.1} parent=131 // pred_check
          %p2105 = pneg %p479
        $region134: #{tpu_custom_call.1} parent=131 // pred_check_branch
          %2107 = sbr.rel (%p2105) target = $region136
        $region135: #{tpu_custom_call.1} parent=131 // pred_region
          %s2108 = sand.u32 %s464, 1
          %s2109 = scalar_lea.sflag [#allocation4], %s2108
          %s2110 = sand.u32 %s464, 1
          %s2111 = smul.addr %s2110, 16
          %s2112 = scalar_lea.vmem [#allocation14], %s2111
          %2113 = dma.done %s2109, 256
        $region136: #{tpu_custom_call.1} parent=131 // pred_fallthru
          _
      $region132: #{tpu_custom_call.1} parent=5 // pred_fallthru
        _
    $region6: #{tpu_custom_call.1} parent=1 // loop_footer
      %s40 = sadd.s32 1, %s36
    $region7: #{tpu_custom_call.1} parent=1 // loop_footer_branch
      %35 = sbr.rel target = $region3
    $region8: #{tpu_custom_call.1} parent=1 // loop_exit
      _
    %2114 = vsyncpa [#allocation3], 1
    %s2115 = scalar_lea.sflag [#allocation3], 1
    %2116 = vsyncpa %s2115, 1
    %2117 = vsyncpa [#allocation6], 1
    %s2118 = scalar_lea.sflag [#allocation6], 1
    %2119 = vsyncpa %s2118, 1
    %2120 = vsyncpa [#allocation9], 1
    %2121 = vsyncpa [#allocation12], 1
    %2122 = vsyncpa [#allocation4], 1
    %s2123 = scalar_lea.sflag [#allocation4], 1
    %2124 = vsyncpa %s2123, 1

</llo_original>
